<compile_context>
chip_gen: v5e
topology: v5e:2x2
jax: 0.10.0
libtpu: 0.0.40
codegen_flags: <defaults>
</compile_context>

<pallas_src>
import functools

import jax
import jax.numpy as jnp
from jax.experimental import pallas as pl
from jax.experimental.pallas import tpu as pltpu


O_PAD = 128  # lane-dense fc output width (padded in prep, sliced in wrapper)


# ----------------------------------------------------------------------------
# Pallas kernel: all LSTM layers + final fc, fused
# ----------------------------------------------------------------------------
def _fused_lstm_fc_kernel(num_layers, T, Bp, H, *refs):
    """refs layout:
        refs[0]                  : x2d    (T*Bp, Din)   bf16, time-major (t outer)
        refs[1+3l .. 3+3l]       : W_ih^T (Din_l, 4H) bf16, W_hh^T (H, 4H) bf16,
                                   bias (1, 4H) f32  — gate columns packed (i,f,o,g)
        refs[1+3L], refs[2+3L]   : fc_w^T (H, O_PAD) bf16, fc_b (1, O_PAD) f32
        refs[3+3L]               : out    (Bp, O_PAD) f32
    """
    f32 = jnp.float32
    bf16 = jnp.bfloat16

    x_ref = refs[0]
    layer_refs = [refs[1 + 3 * l: 4 + 3 * l] for l in range(num_layers)]
    fc_w_ref = refs[1 + 3 * num_layers]
    fc_b_ref = refs[2 + 3 * num_layers]
    out_ref = refs[3 + 3 * num_layers]

    seq = x_ref[...]                                   # bf16 (T*Bp, Din) layer-0 input
    h = None

    for l in range(num_layers):
        w_ih_ref, w_hh_ref, b_ref = layer_refs[l]

        # Whole-sequence input projection: one big bf16 MXU matmul with f32
        # accumulation, off the recurrent critical path.
        gx = (
            jnp.dot(seq, w_ih_ref[...], preferred_element_type=f32)
            + b_ref[...]
        )                                              # f32 (T*Bp, 4H)

        w_hh = w_hh_ref[...]                           # bf16 (H, 4H), vreg resident
        h = jnp.zeros((Bp, H), f32)
        c = jnp.zeros((Bp, H), f32)
        hs = []

        # Short static recurrence (T*num_layers is tiny); slices are
        # sublane-aligned because Bp is a multiple of 8.
        for t in range(T):
            gates = gx[t * Bp:(t + 1) * Bp, :] + jnp.dot(
                h.astype(bf16), w_hh, preferred_element_type=f32)   # f32 (Bp, 4H)
            # Gate columns packed (i, f, o, g): one sigmoid + one tanh per step.
            sg = jax.nn.sigmoid(gates[:, :3 * H])
            g_g = jnp.tanh(gates[:, 3 * H:])
            i_g = sg[:, 0 * H:1 * H]
            f_g = sg[:, 1 * H:2 * H]
            o_g = sg[:, 2 * H:3 * H]
            c = f_g * c + i_g * g_g
            h = o_g * jnp.tanh(c)
            if l + 1 < num_layers:
                hs.append(h)                           # stays in vregs

        if l + 1 < num_layers:
            # Register/VMEM-resident inter-layer sequence; no masked scratch
            # stores, no VMEM round trip.
            seq = jnp.concatenate(hs, axis=0).astype(bf16)   # (T*Bp, H)
        # TODO(synk): PyTorch inter-layer dropout applies only in training
        # mode; inference semantics make it a no-op here.

    # Fused final fc on the last timestep's hidden state; lane-dense store.
    out_ref[...] = (
        jnp.dot(h.astype(bf16), fc_w_ref[...], preferred_element_type=f32)
        + fc_b_ref[...]
    ).astype(out_ref.dtype)


# ----------------------------------------------------------------------------
# Wrapper
# ----------------------------------------------------------------------------
@functools.partial(jax.jit, static_argnames=("num_layers", "output_dim"))
def lstm_model_forward(x, kparams, num_layers, output_dim):
    """Equivalent of Lstm.forward.  x: (B, T, input_dim) (batch_first).
    Also accepts 2-D / 1-D inputs like the PyTorch module (unsqueeze)."""
    if x.ndim == 1:
        x = x[None, None, :]
    elif x.ndim == 2:
        x = x[:, None, :]
    B, T, Din = x.shape
    H = kparams["lstm"][0][1].shape[0]                 # w_hh_t is (H, 4H)
    Bp = max(8, ((B + 7) // 8) * 8)                    # pad batch to a sublane tile

    # Cheap one-time rearrangement: time-major + batch pad + flatten + bf16.
    x_tm = jnp.transpose(x, (1, 0, 2)).astype(jnp.bfloat16)    # (T, B, Din)
    x_tm = jnp.pad(x_tm, ((0, 0), (0, Bp - B), (0, 0)))        # (T, Bp, Din)
    x2d = x_tm.reshape(T * Bp, Din)                            # (T*Bp, Din)

    inputs = [x2d]
    in_specs = [pl.BlockSpec((T * Bp, Din), lambda i: (0, 0))]
    for (w_ih_t, w_hh_t, bias) in kparams["lstm"]:
        inputs += [w_ih_t, w_hh_t, bias]
        in_specs += [
            pl.BlockSpec(w_ih_t.shape, lambda i: (0, 0)),
            pl.BlockSpec(w_hh_t.shape, lambda i: (0, 0)),
            pl.BlockSpec(bias.shape, lambda i: (0, 0)),
        ]
    inputs += [kparams["fc_w_t"], kparams["fc_b"]]
    in_specs += [
        pl.BlockSpec(kparams["fc_w_t"].shape, lambda i: (0, 0)),
        pl.BlockSpec(kparams["fc_b"].shape, lambda i: (0, 0)),
    ]

    kernel = functools.partial(_fused_lstm_fc_kernel, num_layers, T, Bp, H)
    out_p = pl.pallas_call(
        kernel,
        out_shape=jax.ShapeDtypeStruct((Bp, O_PAD), jnp.float32),
        grid_spec=pltpu.PrefetchScalarGridSpec(
            num_scalar_prefetch=0,
            grid=(1,),
            in_specs=in_specs,
            out_specs=pl.BlockSpec((Bp, O_PAD), lambda i: (0, 0)),
        ),
        compiler_params=pltpu.CompilerParams(
            dimension_semantics=("arbitrary",),
        ),
    )(*inputs)
    return out_p[:B, :output_dim]


# ----------------------------------------------------------------------------
# Deterministic PyTorch-layout parameter init (uniform(-1/sqrt(H), 1/sqrt(H)))
# ----------------------------------------------------------------------------
def init_torch_params(key, input_dim, hidden_dim, num_layers, output_dim):
    lstm = []
    bound = 1.0 / float(hidden_dim) ** 0.5
    for layer in range(num_layers):
        din = input_dim if layer == 0 else hidden_dim
        key, k1, k2, k3, k4 = jax.random.split(key, 5)
        w_ih = jax.random.uniform(k1, (4 * hidden_dim, din), jnp.float32, -bound, bound)
        w_hh = jax.random.uniform(k2, (4 * hidden_dim, hidden_dim), jnp.float32, -bound, bound)
        b_ih = jax.random.uniform(k3, (4 * hidden_dim,), jnp.float32, -bound, bound)
        b_hh = jax.random.uniform(k4, (4 * hidden_dim,), jnp.float32, -bound, bound)
        lstm.append((w_ih, w_hh, b_ih, b_hh))
    key, k5, k6 = jax.random.split(key, 3)
    fc_w = jax.random.uniform(k5, (output_dim, hidden_dim), jnp.float32, -bound, bound)
    fc_b = jax.random.uniform(k6, (output_dim,), jnp.float32, -bound, bound)
    return {"lstm": lstm, "fc_w": fc_w, "fc_b": fc_b}


# ----------------------------------------------------------------------------
# One-time conversion PyTorch layout -> kernel layout
#   * gate rows reordered (i,f,g,o) -> (i,f,o,g) so sigmoid gates are
#     lane-contiguous
#   * weights transposed + cast to bf16 (single-pass MXU inputs, half the DMA)
#   * b_ih + b_hh combined, kept f32
#   * fc output lane-padded to O_PAD for an unmasked store
# ----------------------------------------------------------------------------
def prepare_params(tp, hidden_dim):
    H = hidden_dim

    def reorder(w):  # leading dim is 4H in PyTorch gate order i,f,g,o
        return jnp.concatenate(
            [w[0:H], w[H:2 * H], w[3 * H:4 * H], w[2 * H:3 * H]], axis=0)

    lstm = []
    for (w_ih, w_hh, b_ih, b_hh) in tp["lstm"]:
        w_ih_t = reorder(w_ih).T.astype(jnp.bfloat16)          # (Din, 4H)
        w_hh_t = reorder(w_hh).T.astype(jnp.bfloat16)          # (H, 4H)
        bias = reorder(b_ih + b_hh).reshape(1, 4 * H).astype(jnp.float32)
        lstm.append((w_ih_t, w_hh_t, bias))

    O = tp["fc_w"].shape[0]
    fc_w_t = jnp.pad(tp["fc_w"].T, ((0, 0), (0, O_PAD - O))).astype(jnp.bfloat16)
    fc_b = jnp.pad(tp["fc_b"], (0, O_PAD - O)).reshape(1, O_PAD).astype(jnp.float32)
    return {"lstm": lstm, "fc_w_t": fc_w_t, "fc_b": fc_b}


# ----------------------------------------------------------------------------
# Pure-JAX f32 reference (PyTorch semantics, original gate order)
# ----------------------------------------------------------------------------
def lstm_reference(x, tp, num_layers):
    if x.ndim == 1:
        x = x[None, None, :]
    elif x.ndim == 2:
        x = x[:, None, :]
    h_seq = jnp.transpose(x, (1, 0, 2)).astype(jnp.float32)
    B = x.shape[0]
    for layer in range(num_layers):
        w_ih, w_hh, b_ih, b_hh = tp["lstm"][layer]
        H = w_hh.shape[1]
        h = jnp.zeros((B, H), jnp.float32)
        c = jnp.zeros((B, H), jnp.float32)
        outs = []
        for t in range(h_seq.shape[0]):
            gates = h_seq[t] @ w_ih.T + h @ w_hh.T + b_ih + b_hh
            i_g = jax.nn.sigmoid(gates[:, 0 * H:1 * H])
            f_g = jax.nn.sigmoid(gates[:, 1 * H:2 * H])
            g_g = jnp.tanh(gates[:, 2 * H:3 * H])
            o_g = jax.nn.sigmoid(gates[:, 3 * H:4 * H])
            c = f_g * c + i_g * g_g
            h = o_g * jnp.tanh(c)
            outs.append(h)
        h_seq = jnp.stack(outs, axis=0)
    return h_seq[-1] @ tp["fc_w"].T + tp["fc_b"]


if __name__ == "__main__":
    # Small shapes implied by the module's forward: x is (batch, seq, input_dim)
    B, T, INPUT_DIM = 2, 8, 8
    HIDDEN_DIM, NUM_LAYERS, OUTPUT_DIM = 32, 2, 4

    key = jax.random.PRNGKey(0)
    kx, kp = jax.random.split(key)
    x = jax.random.normal(kx, (B, T, INPUT_DIM), jnp.float32)
    torch_params = init_torch_params(kp, INPUT_DIM, HIDDEN_DIM, NUM_LAYERS, OUTPUT_DIM)
    kparams = prepare_params(torch_params, HIDDEN_DIM)

    out = lstm_model_forward(x, kparams, NUM_LAYERS, OUTPUT_DIM)
    out = jax.block_until_ready(out)
    assert out.shape == (B, OUTPUT_DIM), out.shape

    ref = lstm_reference(x, torch_params, NUM_LAYERS)
    # bf16 MXU inputs vs. an all-f32 reference: tolerance loosened (~1e-2 rel).
    assert jnp.allclose(out, ref, atol=2e-2, rtol=2e-2), (out, ref)

    print("KERNEL_OK")
</pallas_src>

<mosaic_0001>
module attributes {stable_mosaic.version = 11 : i64} {
  func.func @_fused_lstm_fc_kernel(%arg0: i32, %arg1: memref<64x8xbf16, #tpu.memory_space<vmem>>, %arg2: memref<8x128xbf16, #tpu.memory_space<vmem>>, %arg3: memref<32x128xbf16, #tpu.memory_space<vmem>>, %arg4: memref<1x128xf32, #tpu.memory_space<vmem>>, %arg5: memref<32x128xbf16, #tpu.memory_space<vmem>>, %arg6: memref<32x128xbf16, #tpu.memory_space<vmem>>, %arg7: memref<1x128xf32, #tpu.memory_space<vmem>>, %arg8: memref<32x128xbf16, #tpu.memory_space<vmem>>, %arg9: memref<1x128xf32, #tpu.memory_space<vmem>>, %arg10: memref<8x128xf32, #tpu.memory_space<vmem>>) attributes {dimension_semantics = [#tpu.dimension_semantics<arbitrary>], iteration_bounds = array<i64: 1>, scalar_prefetch = 0 : i64, scratch_operands = 0 : i64, tpu.core_type = #tpu.core_type<tc>, window_params = [{pipeline_mode = #tpu.pipeline_mode<synchronous>, transform_indices = @transform_0, window_bounds = array<i64: 64, 8>}, {pipeline_mode = #tpu.pipeline_mode<synchronous>, transform_indices = @transform_1, window_bounds = array<i64: 8, 128>}, {pipeline_mode = #tpu.pipeline_mode<synchronous>, transform_indices = @transform_2, window_bounds = array<i64: 32, 128>}, {pipeline_mode = #tpu.pipeline_mode<synchronous>, transform_indices = @transform_3, window_bounds = array<i64: 1, 128>}, {pipeline_mode = #tpu.pipeline_mode<synchronous>, transform_indices = @transform_4, window_bounds = array<i64: 32, 128>}, {pipeline_mode = #tpu.pipeline_mode<synchronous>, transform_indices = @transform_5, window_bounds = array<i64: 32, 128>}, {pipeline_mode = #tpu.pipeline_mode<synchronous>, transform_indices = @transform_6, window_bounds = array<i64: 1, 128>}, {pipeline_mode = #tpu.pipeline_mode<synchronous>, transform_indices = @transform_7, window_bounds = array<i64: 32, 128>}, {pipeline_mode = #tpu.pipeline_mode<synchronous>, transform_indices = @transform_8, window_bounds = array<i64: 1, 128>}, {pipeline_mode = #tpu.pipeline_mode<synchronous>, transform_indices = @transform_9, window_bounds = array<i64: 8, 128>}]} {
    %c0 = arith.constant 0 : index
    %c0_0 = arith.constant 0 : index
    %0 = vector.load %arg1[%c0, %c0_0] : memref<64x8xbf16, #tpu.memory_space<vmem>>, vector<64x8xbf16>
    %c0_1 = arith.constant 0 : index
    %c0_2 = arith.constant 0 : index
    %1 = vector.load %arg2[%c0_1, %c0_2] : memref<8x128xbf16, #tpu.memory_space<vmem>>, vector<8x128xbf16>
    %cst = arith.constant dense<0.000000e+00> : vector<64x128xf32>
    %2 = tpu.matmul %0, %1, %cst {dimension_numbers = #tpu.dot_dimension_numbers<[1], [0], [0], [1], [0, 0, 1, 1], [], []>} : vector<64x8xbf16>, vector<8x128xbf16>, vector<64x128xf32> -> vector<64x128xf32>
    %c0_3 = arith.constant 0 : index
    %c0_4 = arith.constant 0 : index
    %3 = vector.load %arg4[%c0_3, %c0_4] : memref<1x128xf32, #tpu.memory_space<vmem>>, vector<1x128xf32>
    %4 = vector.broadcast %3 : vector<1x128xf32> to vector<64x128xf32>
    %5 = arith.addf %2, %4 : vector<64x128xf32>
    %c0_5 = arith.constant 0 : index
    %c0_6 = arith.constant 0 : index
    %6 = vector.load %arg3[%c0_5, %c0_6] : memref<32x128xbf16, #tpu.memory_space<vmem>>, vector<32x128xbf16>
    %cst_7 = arith.constant 0.000000e+00 : f32
    %7 = vector.broadcast %cst_7 : f32 to vector<8x32xf32>
    %cst_8 = arith.constant 0.000000e+00 : f32
    %8 = vector.broadcast %cst_8 : f32 to vector<8x32xf32>
    %9 = vector.extract_strided_slice %5 {offsets = [0, 0], sizes = [8, 128], strides = [1, 1]} : vector<64x128xf32> to vector<8x128xf32>
    %10 = arith.truncf %7 : vector<8x32xf32> to vector<8x32xbf16>
    %cst_9 = arith.constant dense<0.000000e+00> : vector<8x128xf32>
    %11 = tpu.matmul %10, %6, %cst_9 {dimension_numbers = #tpu.dot_dimension_numbers<[1], [0], [0], [1], [0, 0, 1, 1], [], []>} : vector<8x32xbf16>, vector<32x128xbf16>, vector<8x128xf32> -> vector<8x128xf32>
    %12 = arith.addf %9, %11 : vector<8x128xf32>
    %13 = vector.extract_strided_slice %12 {offsets = [0, 0], sizes = [8, 96], strides = [1, 1]} : vector<8x128xf32> to vector<8x96xf32>
    %14 = arith.negf %13 : vector<8x96xf32>
    %15 = math.exp %14 : vector<8x96xf32>
    %cst_10 = arith.constant 1.000000e+00 : f32
    %16 = vector.broadcast %cst_10 : f32 to vector<8x96xf32>
    %17 = arith.addf %16, %15 : vector<8x96xf32>
    %18 = arith.divf %16, %17 : vector<8x96xf32>
    %19 = vector.extract_strided_slice %12 {offsets = [0, 96], sizes = [8, 32], strides = [1, 1]} : vector<8x128xf32> to vector<8x32xf32>
    %20 = math.tanh %19 : vector<8x32xf32>
    %21 = vector.extract_strided_slice %18 {offsets = [0, 0], sizes = [8, 32], strides = [1, 1]} : vector<8x96xf32> to vector<8x32xf32>
    %22 = vector.extract_strided_slice %18 {offsets = [0, 32], sizes = [8, 32], strides = [1, 1]} : vector<8x96xf32> to vector<8x32xf32>
    %23 = vector.extract_strided_slice %18 {offsets = [0, 64], sizes = [8, 32], strides = [1, 1]} : vector<8x96xf32> to vector<8x32xf32>
    %24 = arith.mulf %22, %8 : vector<8x32xf32>
    %25 = arith.mulf %21, %20 : vector<8x32xf32>
    %26 = arith.addf %24, %25 : vector<8x32xf32>
    %27 = math.tanh %26 : vector<8x32xf32>
    %28 = arith.mulf %23, %27 : vector<8x32xf32>
    %29 = vector.extract_strided_slice %5 {offsets = [8, 0], sizes = [8, 128], strides = [1, 1]} : vector<64x128xf32> to vector<8x128xf32>
    %30 = arith.truncf %28 : vector<8x32xf32> to vector<8x32xbf16>
    %cst_11 = arith.constant dense<0.000000e+00> : vector<8x128xf32>
    %31 = tpu.matmul %30, %6, %cst_11 {dimension_numbers = #tpu.dot_dimension_numbers<[1], [0], [0], [1], [0, 0, 1, 1], [], []>} : vector<8x32xbf16>, vector<32x128xbf16>, vector<8x128xf32> -> vector<8x128xf32>
    %32 = arith.addf %29, %31 : vector<8x128xf32>
    %33 = vector.extract_strided_slice %32 {offsets = [0, 0], sizes = [8, 96], strides = [1, 1]} : vector<8x128xf32> to vector<8x96xf32>
    %34 = arith.negf %33 : vector<8x96xf32>
    %35 = math.exp %34 : vector<8x96xf32>
    %cst_12 = arith.constant 1.000000e+00 : f32
    %36 = vector.broadcast %cst_12 : f32 to vector<8x96xf32>
    %37 = arith.addf %36, %35 : vector<8x96xf32>
    %38 = arith.divf %36, %37 : vector<8x96xf32>
    %39 = vector.extract_strided_slice %32 {offsets = [0, 96], sizes = [8, 32], strides = [1, 1]} : vector<8x128xf32> to vector<8x32xf32>
    %40 = math.tanh %39 : vector<8x32xf32>
    %41 = vector.extract_strided_slice %38 {offsets = [0, 0], sizes = [8, 32], strides = [1, 1]} : vector<8x96xf32> to vector<8x32xf32>
    %42 = vector.extract_strided_slice %38 {offsets = [0, 32], sizes = [8, 32], strides = [1, 1]} : vector<8x96xf32> to vector<8x32xf32>
    %43 = vector.extract_strided_slice %38 {offsets = [0, 64], sizes = [8, 32], strides = [1, 1]} : vector<8x96xf32> to vector<8x32xf32>
    %44 = arith.mulf %42, %26 : vector<8x32xf32>
    %45 = arith.mulf %41, %40 : vector<8x32xf32>
    %46 = arith.addf %44, %45 : vector<8x32xf32>
    %47 = math.tanh %46 : vector<8x32xf32>
    %48 = arith.mulf %43, %47 : vector<8x32xf32>
    %49 = vector.extract_strided_slice %5 {offsets = [16, 0], sizes = [8, 128], strides = [1, 1]} : vector<64x128xf32> to vector<8x128xf32>
    %50 = arith.truncf %48 : vector<8x32xf32> to vector<8x32xbf16>
    %cst_13 = arith.constant dense<0.000000e+00> : vector<8x128xf32>
    %51 = tpu.matmul %50, %6, %cst_13 {dimension_numbers = #tpu.dot_dimension_numbers<[1], [0], [0], [1], [0, 0, 1, 1], [], []>} : vector<8x32xbf16>, vector<32x128xbf16>, vector<8x128xf32> -> vector<8x128xf32>
    %52 = arith.addf %49, %51 : vector<8x128xf32>
    %53 = vector.extract_strided_slice %52 {offsets = [0, 0], sizes = [8, 96], strides = [1, 1]} : vector<8x128xf32> to vector<8x96xf32>
    %54 = arith.negf %53 : vector<8x96xf32>
    %55 = math.exp %54 : vector<8x96xf32>
    %cst_14 = arith.constant 1.000000e+00 : f32
    %56 = vector.broadcast %cst_14 : f32 to vector<8x96xf32>
    %57 = arith.addf %56, %55 : vector<8x96xf32>
    %58 = arith.divf %56, %57 : vector<8x96xf32>
    %59 = vector.extract_strided_slice %52 {offsets = [0, 96], sizes = [8, 32], strides = [1, 1]} : vector<8x128xf32> to vector<8x32xf32>
    %60 = math.tanh %59 : vector<8x32xf32>
    %61 = vector.extract_strided_slice %58 {offsets = [0, 0], sizes = [8, 32], strides = [1, 1]} : vector<8x96xf32> to vector<8x32xf32>
    %62 = vector.extract_strided_slice %58 {offsets = [0, 32], sizes = [8, 32], strides = [1, 1]} : vector<8x96xf32> to vector<8x32xf32>
    %63 = vector.extract_strided_slice %58 {offsets = [0, 64], sizes = [8, 32], strides = [1, 1]} : vector<8x96xf32> to vector<8x32xf32>
    %64 = arith.mulf %62, %46 : vector<8x32xf32>
    %65 = arith.mulf %61, %60 : vector<8x32xf32>
    %66 = arith.addf %64, %65 : vector<8x32xf32>
    %67 = math.tanh %66 : vector<8x32xf32>
    %68 = arith.mulf %63, %67 : vector<8x32xf32>
    %69 = vector.extract_strided_slice %5 {offsets = [24, 0], sizes = [8, 128], strides = [1, 1]} : vector<64x128xf32> to vector<8x128xf32>
    %70 = arith.truncf %68 : vector<8x32xf32> to vector<8x32xbf16>
    %cst_15 = arith.constant dense<0.000000e+00> : vector<8x128xf32>
    %71 = tpu.matmul %70, %6, %cst_15 {dimension_numbers = #tpu.dot_dimension_numbers<[1], [0], [0], [1], [0, 0, 1, 1], [], []>} : vector<8x32xbf16>, vector<32x128xbf16>, vector<8x128xf32> -> vector<8x128xf32>
    %72 = arith.addf %69, %71 : vector<8x128xf32>
    %73 = vector.extract_strided_slice %72 {offsets = [0, 0], sizes = [8, 96], strides = [1, 1]} : vector<8x128xf32> to vector<8x96xf32>
    %74 = arith.negf %73 : vector<8x96xf32>
    %75 = math.exp %74 : vector<8x96xf32>
    %cst_16 = arith.constant 1.000000e+00 : f32
    %76 = vector.broadcast %cst_16 : f32 to vector<8x96xf32>
    %77 = arith.addf %76, %75 : vector<8x96xf32>
    %78 = arith.divf %76, %77 : vector<8x96xf32>
    %79 = vector.extract_strided_slice %72 {offsets = [0, 96], sizes = [8, 32], strides = [1, 1]} : vector<8x128xf32> to vector<8x32xf32>
    %80 = math.tanh %79 : vector<8x32xf32>
    %81 = vector.extract_strided_slice %78 {offsets = [0, 0], sizes = [8, 32], strides = [1, 1]} : vector<8x96xf32> to vector<8x32xf32>
    %82 = vector.extract_strided_slice %78 {offsets = [0, 32], sizes = [8, 32], strides = [1, 1]} : vector<8x96xf32> to vector<8x32xf32>
    %83 = vector.extract_strided_slice %78 {offsets = [0, 64], sizes = [8, 32], strides = [1, 1]} : vector<8x96xf32> to vector<8x32xf32>
    %84 = arith.mulf %82, %66 : vector<8x32xf32>
    %85 = arith.mulf %81, %80 : vector<8x32xf32>
    %86 = arith.addf %84, %85 : vector<8x32xf32>
    %87 = math.tanh %86 : vector<8x32xf32>
    %88 = arith.mulf %83, %87 : vector<8x32xf32>
    %89 = vector.extract_strided_slice %5 {offsets = [32, 0], sizes = [8, 128], strides = [1, 1]} : vector<64x128xf32> to vector<8x128xf32>
    %90 = arith.truncf %88 : vector<8x32xf32> to vector<8x32xbf16>
    %cst_17 = arith.constant dense<0.000000e+00> : vector<8x128xf32>
    %91 = tpu.matmul %90, %6, %cst_17 {dimension_numbers = #tpu.dot_dimension_numbers<[1], [0], [0], [1], [0, 0, 1, 1], [], []>} : vector<8x32xbf16>, vector<32x128xbf16>, vector<8x128xf32> -> vector<8x128xf32>
    %92 = arith.addf %89, %91 : vector<8x128xf32>
    %93 = vector.extract_strided_slice %92 {offsets = [0, 0], sizes = [8, 96], strides = [1, 1]} : vector<8x128xf32> to vector<8x96xf32>
    %94 = arith.negf %93 : vector<8x96xf32>
    %95 = math.exp %94 : vector<8x96xf32>
    %cst_18 = arith.constant 1.000000e+00 : f32
    %96 = vector.broadcast %cst_18 : f32 to vector<8x96xf32>
    %97 = arith.addf %96, %95 : vector<8x96xf32>
    %98 = arith.divf %96, %97 : vector<8x96xf32>
    %99 = vector.extract_strided_slice %92 {offsets = [0, 96], sizes = [8, 32], strides = [1, 1]} : vector<8x128xf32> to vector<8x32xf32>
    %100 = math.tanh %99 : vector<8x32xf32>
    %101 = vector.extract_strided_slice %98 {offsets = [0, 0], sizes = [8, 32], strides = [1, 1]} : vector<8x96xf32> to vector<8x32xf32>
    %102 = vector.extract_strided_slice %98 {offsets = [0, 32], sizes = [8, 32], strides = [1, 1]} : vector<8x96xf32> to vector<8x32xf32>
    %103 = vector.extract_strided_slice %98 {offsets = [0, 64], sizes = [8, 32], strides = [1, 1]} : vector<8x96xf32> to vector<8x32xf32>
    %104 = arith.mulf %102, %86 : vector<8x32xf32>
    %105 = arith.mulf %101, %100 : vector<8x32xf32>
    %106 = arith.addf %104, %105 : vector<8x32xf32>
    %107 = math.tanh %106 : vector<8x32xf32>
    %108 = arith.mulf %103, %107 : vector<8x32xf32>
    %109 = vector.extract_strided_slice %5 {offsets = [40, 0], sizes = [8, 128], strides = [1, 1]} : vector<64x128xf32> to vector<8x128xf32>
    %110 = arith.truncf %108 : vector<8x32xf32> to vector<8x32xbf16>
    %cst_19 = arith.constant dense<0.000000e+00> : vector<8x128xf32>
    %111 = tpu.matmul %110, %6, %cst_19 {dimension_numbers = #tpu.dot_dimension_numbers<[1], [0], [0], [1], [0, 0, 1, 1], [], []>} : vector<8x32xbf16>, vector<32x128xbf16>, vector<8x128xf32> -> vector<8x128xf32>
    %112 = arith.addf %109, %111 : vector<8x128xf32>
    %113 = vector.extract_strided_slice %112 {offsets = [0, 0], sizes = [8, 96], strides = [1, 1]} : vector<8x128xf32> to vector<8x96xf32>
    %114 = arith.negf %113 : vector<8x96xf32>
    %115 = math.exp %114 : vector<8x96xf32>
    %cst_20 = arith.constant 1.000000e+00 : f32
    %116 = vector.broadcast %cst_20 : f32 to vector<8x96xf32>
    %117 = arith.addf %116, %115 : vector<8x96xf32>
    %118 = arith.divf %116, %117 : vector<8x96xf32>
    %119 = vector.extract_strided_slice %112 {offsets = [0, 96], sizes = [8, 32], strides = [1, 1]} : vector<8x128xf32> to vector<8x32xf32>
    %120 = math.tanh %119 : vector<8x32xf32>
    %121 = vector.extract_strided_slice %118 {offsets = [0, 0], sizes = [8, 32], strides = [1, 1]} : vector<8x96xf32> to vector<8x32xf32>
    %122 = vector.extract_strided_slice %118 {offsets = [0, 32], sizes = [8, 32], strides = [1, 1]} : vector<8x96xf32> to vector<8x32xf32>
    %123 = vector.extract_strided_slice %118 {offsets = [0, 64], sizes = [8, 32], strides = [1, 1]} : vector<8x96xf32> to vector<8x32xf32>
    %124 = arith.mulf %122, %106 : vector<8x32xf32>
    %125 = arith.mulf %121, %120 : vector<8x32xf32>
    %126 = arith.addf %124, %125 : vector<8x32xf32>
    %127 = math.tanh %126 : vector<8x32xf32>
    %128 = arith.mulf %123, %127 : vector<8x32xf32>
    %129 = vector.extract_strided_slice %5 {offsets = [48, 0], sizes = [8, 128], strides = [1, 1]} : vector<64x128xf32> to vector<8x128xf32>
    %130 = arith.truncf %128 : vector<8x32xf32> to vector<8x32xbf16>
    %cst_21 = arith.constant dense<0.000000e+00> : vector<8x128xf32>
    %131 = tpu.matmul %130, %6, %cst_21 {dimension_numbers = #tpu.dot_dimension_numbers<[1], [0], [0], [1], [0, 0, 1, 1], [], []>} : vector<8x32xbf16>, vector<32x128xbf16>, vector<8x128xf32> -> vector<8x128xf32>
    %132 = arith.addf %129, %131 : vector<8x128xf32>
    %133 = vector.extract_strided_slice %132 {offsets = [0, 0], sizes = [8, 96], strides = [1, 1]} : vector<8x128xf32> to vector<8x96xf32>
    %134 = arith.negf %133 : vector<8x96xf32>
    %135 = math.exp %134 : vector<8x96xf32>
    %cst_22 = arith.constant 1.000000e+00 : f32
    %136 = vector.broadcast %cst_22 : f32 to vector<8x96xf32>
    %137 = arith.addf %136, %135 : vector<8x96xf32>
    %138 = arith.divf %136, %137 : vector<8x96xf32>
    %139 = vector.extract_strided_slice %132 {offsets = [0, 96], sizes = [8, 32], strides = [1, 1]} : vector<8x128xf32> to vector<8x32xf32>
    %140 = math.tanh %139 : vector<8x32xf32>
    %141 = vector.extract_strided_slice %138 {offsets = [0, 0], sizes = [8, 32], strides = [1, 1]} : vector<8x96xf32> to vector<8x32xf32>
    %142 = vector.extract_strided_slice %138 {offsets = [0, 32], sizes = [8, 32], strides = [1, 1]} : vector<8x96xf32> to vector<8x32xf32>
    %143 = vector.extract_strided_slice %138 {offsets = [0, 64], sizes = [8, 32], strides = [1, 1]} : vector<8x96xf32> to vector<8x32xf32>
    %144 = arith.mulf %142, %126 : vector<8x32xf32>
    %145 = arith.mulf %141, %140 : vector<8x32xf32>
    %146 = arith.addf %144, %145 : vector<8x32xf32>
    %147 = math.tanh %146 : vector<8x32xf32>
    %148 = arith.mulf %143, %147 : vector<8x32xf32>
    %149 = vector.extract_strided_slice %5 {offsets = [56, 0], sizes = [8, 128], strides = [1, 1]} : vector<64x128xf32> to vector<8x128xf32>
    %150 = arith.truncf %148 : vector<8x32xf32> to vector<8x32xbf16>
    %cst_23 = arith.constant dense<0.000000e+00> : vector<8x128xf32>
    %151 = tpu.matmul %150, %6, %cst_23 {dimension_numbers = #tpu.dot_dimension_numbers<[1], [0], [0], [1], [0, 0, 1, 1], [], []>} : vector<8x32xbf16>, vector<32x128xbf16>, vector<8x128xf32> -> vector<8x128xf32>
    %152 = arith.addf %149, %151 : vector<8x128xf32>
    %153 = vector.extract_strided_slice %152 {offsets = [0, 0], sizes = [8, 96], strides = [1, 1]} : vector<8x128xf32> to vector<8x96xf32>
    %154 = arith.negf %153 : vector<8x96xf32>
    %155 = math.exp %154 : vector<8x96xf32>
    %cst_24 = arith.constant 1.000000e+00 : f32
    %156 = vector.broadcast %cst_24 : f32 to vector<8x96xf32>
    %157 = arith.addf %156, %155 : vector<8x96xf32>
    %158 = arith.divf %156, %157 : vector<8x96xf32>
    %159 = vector.extract_strided_slice %152 {offsets = [0, 96], sizes = [8, 32], strides = [1, 1]} : vector<8x128xf32> to vector<8x32xf32>
    %160 = math.tanh %159 : vector<8x32xf32>
    %161 = vector.extract_strided_slice %158 {offsets = [0, 0], sizes = [8, 32], strides = [1, 1]} : vector<8x96xf32> to vector<8x32xf32>
    %162 = vector.extract_strided_slice %158 {offsets = [0, 32], sizes = [8, 32], strides = [1, 1]} : vector<8x96xf32> to vector<8x32xf32>
    %163 = vector.extract_strided_slice %158 {offsets = [0, 64], sizes = [8, 32], strides = [1, 1]} : vector<8x96xf32> to vector<8x32xf32>
    %164 = arith.mulf %162, %146 : vector<8x32xf32>
    %165 = arith.mulf %161, %160 : vector<8x32xf32>
    %166 = arith.addf %164, %165 : vector<8x32xf32>
    %167 = math.tanh %166 : vector<8x32xf32>
    %168 = arith.mulf %163, %167 : vector<8x32xf32>
    %169 = tpu.concatenate %28, %48, %68, %88, %108, %128, %148, %168 in 0 : vector<8x32xf32>, vector<8x32xf32>, vector<8x32xf32>, vector<8x32xf32>, vector<8x32xf32>, vector<8x32xf32>, vector<8x32xf32>, vector<8x32xf32> -> vector<64x32xf32>
    %170 = arith.truncf %169 : vector<64x32xf32> to vector<64x32xbf16>
    %c0_25 = arith.constant 0 : index
    %c0_26 = arith.constant 0 : index
    %171 = vector.load %arg5[%c0_25, %c0_26] : memref<32x128xbf16, #tpu.memory_space<vmem>>, vector<32x128xbf16>
    %cst_27 = arith.constant dense<0.000000e+00> : vector<64x128xf32>
    %172 = tpu.matmul %170, %171, %cst_27 {dimension_numbers = #tpu.dot_dimension_numbers<[1], [0], [0], [1], [0, 0, 1, 1], [], []>} : vector<64x32xbf16>, vector<32x128xbf16>, vector<64x128xf32> -> vector<64x128xf32>
    %c0_28 = arith.constant 0 : index
    %c0_29 = arith.constant 0 : index
    %173 = vector.load %arg7[%c0_28, %c0_29] : memref<1x128xf32, #tpu.memory_space<vmem>>, vector<1x128xf32>
    %174 = vector.broadcast %173 : vector<1x128xf32> to vector<64x128xf32>
    %175 = arith.addf %172, %174 : vector<64x128xf32>
    %c0_30 = arith.constant 0 : index
    %c0_31 = arith.constant 0 : index
    %176 = vector.load %arg6[%c0_30, %c0_31] : memref<32x128xbf16, #tpu.memory_space<vmem>>, vector<32x128xbf16>
    %cst_32 = arith.constant 0.000000e+00 : f32
    %177 = vector.broadcast %cst_32 : f32 to vector<8x32xf32>
    %cst_33 = arith.constant 0.000000e+00 : f32
    %178 = vector.broadcast %cst_33 : f32 to vector<8x32xf32>
    %179 = vector.extract_strided_slice %175 {offsets = [0, 0], sizes = [8, 128], strides = [1, 1]} : vector<64x128xf32> to vector<8x128xf32>
    %180 = arith.truncf %177 : vector<8x32xf32> to vector<8x32xbf16>
    %cst_34 = arith.constant dense<0.000000e+00> : vector<8x128xf32>
    %181 = tpu.matmul %180, %176, %cst_34 {dimension_numbers = #tpu.dot_dimension_numbers<[1], [0], [0], [1], [0, 0, 1, 1], [], []>} : vector<8x32xbf16>, vector<32x128xbf16>, vector<8x128xf32> -> vector<8x128xf32>
    %182 = arith.addf %179, %181 : vector<8x128xf32>
    %183 = vector.extract_strided_slice %182 {offsets = [0, 0], sizes = [8, 96], strides = [1, 1]} : vector<8x128xf32> to vector<8x96xf32>
    %184 = arith.negf %183 : vector<8x96xf32>
    %185 = math.exp %184 : vector<8x96xf32>
    %cst_35 = arith.constant 1.000000e+00 : f32
    %186 = vector.broadcast %cst_35 : f32 to vector<8x96xf32>
    %187 = arith.addf %186, %185 : vector<8x96xf32>
    %188 = arith.divf %186, %187 : vector<8x96xf32>
    %189 = vector.extract_strided_slice %182 {offsets = [0, 96], sizes = [8, 32], strides = [1, 1]} : vector<8x128xf32> to vector<8x32xf32>
    %190 = math.tanh %189 : vector<8x32xf32>
    %191 = vector.extract_strided_slice %188 {offsets = [0, 0], sizes = [8, 32], strides = [1, 1]} : vector<8x96xf32> to vector<8x32xf32>
    %192 = vector.extract_strided_slice %188 {offsets = [0, 32], sizes = [8, 32], strides = [1, 1]} : vector<8x96xf32> to vector<8x32xf32>
    %193 = vector.extract_strided_slice %188 {offsets = [0, 64], sizes = [8, 32], strides = [1, 1]} : vector<8x96xf32> to vector<8x32xf32>
    %194 = arith.mulf %192, %178 : vector<8x32xf32>
    %195 = arith.mulf %191, %190 : vector<8x32xf32>
    %196 = arith.addf %194, %195 : vector<8x32xf32>
    %197 = math.tanh %196 : vector<8x32xf32>
    %198 = arith.mulf %193, %197 : vector<8x32xf32>
    %199 = vector.extract_strided_slice %175 {offsets = [8, 0], sizes = [8, 128], strides = [1, 1]} : vector<64x128xf32> to vector<8x128xf32>
    %200 = arith.truncf %198 : vector<8x32xf32> to vector<8x32xbf16>
    %cst_36 = arith.constant dense<0.000000e+00> : vector<8x128xf32>
    %201 = tpu.matmul %200, %176, %cst_36 {dimension_numbers = #tpu.dot_dimension_numbers<[1], [0], [0], [1], [0, 0, 1, 1], [], []>} : vector<8x32xbf16>, vector<32x128xbf16>, vector<8x128xf32> -> vector<8x128xf32>
    %202 = arith.addf %199, %201 : vector<8x128xf32>
    %203 = vector.extract_strided_slice %202 {offsets = [0, 0], sizes = [8, 96], strides = [1, 1]} : vector<8x128xf32> to vector<8x96xf32>
    %204 = arith.negf %203 : vector<8x96xf32>
    %205 = math.exp %204 : vector<8x96xf32>
    %cst_37 = arith.constant 1.000000e+00 : f32
    %206 = vector.broadcast %cst_37 : f32 to vector<8x96xf32>
    %207 = arith.addf %206, %205 : vector<8x96xf32>
    %208 = arith.divf %206, %207 : vector<8x96xf32>
    %209 = vector.extract_strided_slice %202 {offsets = [0, 96], sizes = [8, 32], strides = [1, 1]} : vector<8x128xf32> to vector<8x32xf32>
    %210 = math.tanh %209 : vector<8x32xf32>
    %211 = vector.extract_strided_slice %208 {offsets = [0, 0], sizes = [8, 32], strides = [1, 1]} : vector<8x96xf32> to vector<8x32xf32>
    %212 = vector.extract_strided_slice %208 {offsets = [0, 32], sizes = [8, 32], strides = [1, 1]} : vector<8x96xf32> to vector<8x32xf32>
    %213 = vector.extract_strided_slice %208 {offsets = [0, 64], sizes = [8, 32], strides = [1, 1]} : vector<8x96xf32> to vector<8x32xf32>
    %214 = arith.mulf %212, %196 : vector<8x32xf32>
    %215 = arith.mulf %211, %210 : vector<8x32xf32>
    %216 = arith.addf %214, %215 : vector<8x32xf32>
    %217 = math.tanh %216 : vector<8x32xf32>
    %218 = arith.mulf %213, %217 : vector<8x32xf32>
    %219 = vector.extract_strided_slice %175 {offsets = [16, 0], sizes = [8, 128], strides = [1, 1]} : vector<64x128xf32> to vector<8x128xf32>
    %220 = arith.truncf %218 : vector<8x32xf32> to vector<8x32xbf16>
    %cst_38 = arith.constant dense<0.000000e+00> : vector<8x128xf32>
    %221 = tpu.matmul %220, %176, %cst_38 {dimension_numbers = #tpu.dot_dimension_numbers<[1], [0], [0], [1], [0, 0, 1, 1], [], []>} : vector<8x32xbf16>, vector<32x128xbf16>, vector<8x128xf32> -> vector<8x128xf32>
    %222 = arith.addf %219, %221 : vector<8x128xf32>
    %223 = vector.extract_strided_slice %222 {offsets = [0, 0], sizes = [8, 96], strides = [1, 1]} : vector<8x128xf32> to vector<8x96xf32>
    %224 = arith.negf %223 : vector<8x96xf32>
    %225 = math.exp %224 : vector<8x96xf32>
    %cst_39 = arith.constant 1.000000e+00 : f32
    %226 = vector.broadcast %cst_39 : f32 to vector<8x96xf32>
    %227 = arith.addf %226, %225 : vector<8x96xf32>
    %228 = arith.divf %226, %227 : vector<8x96xf32>
    %229 = vector.extract_strided_slice %222 {offsets = [0, 96], sizes = [8, 32], strides = [1, 1]} : vector<8x128xf32> to vector<8x32xf32>
    %230 = math.tanh %229 : vector<8x32xf32>
    %231 = vector.extract_strided_slice %228 {offsets = [0, 0], sizes = [8, 32], strides = [1, 1]} : vector<8x96xf32> to vector<8x32xf32>
    %232 = vector.extract_strided_slice %228 {offsets = [0, 32], sizes = [8, 32], strides = [1, 1]} : vector<8x96xf32> to vector<8x32xf32>
    %233 = vector.extract_strided_slice %228 {offsets = [0, 64], sizes = [8, 32], strides = [1, 1]} : vector<8x96xf32> to vector<8x32xf32>
    %234 = arith.mulf %232, %216 : vector<8x32xf32>
    %235 = arith.mulf %231, %230 : vector<8x32xf32>
    %236 = arith.addf %234, %235 : vector<8x32xf32>
    %237 = math.tanh %236 : vector<8x32xf32>
    %238 = arith.mulf %233, %237 : vector<8x32xf32>
    %239 = vector.extract_strided_slice %175 {offsets = [24, 0], sizes = [8, 128], strides = [1, 1]} : vector<64x128xf32> to vector<8x128xf32>
    %240 = arith.truncf %238 : vector<8x32xf32> to vector<8x32xbf16>
    %cst_40 = arith.constant dense<0.000000e+00> : vector<8x128xf32>
    %241 = tpu.matmul %240, %176, %cst_40 {dimension_numbers = #tpu.dot_dimension_numbers<[1], [0], [0], [1], [0, 0, 1, 1], [], []>} : vector<8x32xbf16>, vector<32x128xbf16>, vector<8x128xf32> -> vector<8x128xf32>
    %242 = arith.addf %239, %241 : vector<8x128xf32>
    %243 = vector.extract_strided_slice %242 {offsets = [0, 0], sizes = [8, 96], strides = [1, 1]} : vector<8x128xf32> to vector<8x96xf32>
    %244 = arith.negf %243 : vector<8x96xf32>
    %245 = math.exp %244 : vector<8x96xf32>
    %cst_41 = arith.constant 1.000000e+00 : f32
    %246 = vector.broadcast %cst_41 : f32 to vector<8x96xf32>
    %247 = arith.addf %246, %245 : vector<8x96xf32>
    %248 = arith.divf %246, %247 : vector<8x96xf32>
    %249 = vector.extract_strided_slice %242 {offsets = [0, 96], sizes = [8, 32], strides = [1, 1]} : vector<8x128xf32> to vector<8x32xf32>
    %250 = math.tanh %249 : vector<8x32xf32>
    %251 = vector.extract_strided_slice %248 {offsets = [0, 0], sizes = [8, 32], strides = [1, 1]} : vector<8x96xf32> to vector<8x32xf32>
    %252 = vector.extract_strided_slice %248 {offsets = [0, 32], sizes = [8, 32], strides = [1, 1]} : vector<8x96xf32> to vector<8x32xf32>
    %253 = vector.extract_strided_slice %248 {offsets = [0, 64], sizes = [8, 32], strides = [1, 1]} : vector<8x96xf32> to vector<8x32xf32>
    %254 = arith.mulf %252, %236 : vector<8x32xf32>
    %255 = arith.mulf %251, %250 : vector<8x32xf32>
    %256 = arith.addf %254, %255 : vector<8x32xf32>
    %257 = math.tanh %256 : vector<8x32xf32>
    %258 = arith.mulf %253, %257 : vector<8x32xf32>
    %259 = vector.extract_strided_slice %175 {offsets = [32, 0], sizes = [8, 128], strides = [1, 1]} : vector<64x128xf32> to vector<8x128xf32>
    %260 = arith.truncf %258 : vector<8x32xf32> to vector<8x32xbf16>
    %cst_42 = arith.constant dense<0.000000e+00> : vector<8x128xf32>
    %261 = tpu.matmul %260, %176, %cst_42 {dimension_numbers = #tpu.dot_dimension_numbers<[1], [0], [0], [1], [0, 0, 1, 1], [], []>} : vector<8x32xbf16>, vector<32x128xbf16>, vector<8x128xf32> -> vector<8x128xf32>
    %262 = arith.addf %259, %261 : vector<8x128xf32>
    %263 = vector.extract_strided_slice %262 {offsets = [0, 0], sizes = [8, 96], strides = [1, 1]} : vector<8x128xf32> to vector<8x96xf32>
    %264 = arith.negf %263 : vector<8x96xf32>
    %265 = math.exp %264 : vector<8x96xf32>
    %cst_43 = arith.constant 1.000000e+00 : f32
    %266 = vector.broadcast %cst_43 : f32 to vector<8x96xf32>
    %267 = arith.addf %266, %265 : vector<8x96xf32>
    %268 = arith.divf %266, %267 : vector<8x96xf32>
    %269 = vector.extract_strided_slice %262 {offsets = [0, 96], sizes = [8, 32], strides = [1, 1]} : vector<8x128xf32> to vector<8x32xf32>
    %270 = math.tanh %269 : vector<8x32xf32>
    %271 = vector.extract_strided_slice %268 {offsets = [0, 0], sizes = [8, 32], strides = [1, 1]} : vector<8x96xf32> to vector<8x32xf32>
    %272 = vector.extract_strided_slice %268 {offsets = [0, 32], sizes = [8, 32], strides = [1, 1]} : vector<8x96xf32> to vector<8x32xf32>
    %273 = vector.extract_strided_slice %268 {offsets = [0, 64], sizes = [8, 32], strides = [1, 1]} : vector<8x96xf32> to vector<8x32xf32>
    %274 = arith.mulf %272, %256 : vector<8x32xf32>
    %275 = arith.mulf %271, %270 : vector<8x32xf32>
    %276 = arith.addf %274, %275 : vector<8x32xf32>
    %277 = math.tanh %276 : vector<8x32xf32>
    %278 = arith.mulf %273, %277 : vector<8x32xf32>
    %279 = vector.extract_strided_slice %175 {offsets = [40, 0], sizes = [8, 128], strides = [1, 1]} : vector<64x128xf32> to vector<8x128xf32>
    %280 = arith.truncf %278 : vector<8x32xf32> to vector<8x32xbf16>
    %cst_44 = arith.constant dense<0.000000e+00> : vector<8x128xf32>
    %281 = tpu.matmul %280, %176, %cst_44 {dimension_numbers = #tpu.dot_dimension_numbers<[1], [0], [0], [1], [0, 0, 1, 1], [], []>} : vector<8x32xbf16>, vector<32x128xbf16>, vector<8x128xf32> -> vector<8x128xf32>
    %282 = arith.addf %279, %281 : vector<8x128xf32>
    %283 = vector.extract_strided_slice %282 {offsets = [0, 0], sizes = [8, 96], strides = [1, 1]} : vector<8x128xf32> to vector<8x96xf32>
    %284 = arith.negf %283 : vector<8x96xf32>
    %285 = math.exp %284 : vector<8x96xf32>
    %cst_45 = arith.constant 1.000000e+00 : f32
    %286 = vector.broadcast %cst_45 : f32 to vector<8x96xf32>
    %287 = arith.addf %286, %285 : vector<8x96xf32>
    %288 = arith.divf %286, %287 : vector<8x96xf32>
    %289 = vector.extract_strided_slice %282 {offsets = [0, 96], sizes = [8, 32], strides = [1, 1]} : vector<8x128xf32> to vector<8x32xf32>
    %290 = math.tanh %289 : vector<8x32xf32>
    %291 = vector.extract_strided_slice %288 {offsets = [0, 0], sizes = [8, 32], strides = [1, 1]} : vector<8x96xf32> to vector<8x32xf32>
    %292 = vector.extract_strided_slice %288 {offsets = [0, 32], sizes = [8, 32], strides = [1, 1]} : vector<8x96xf32> to vector<8x32xf32>
    %293 = vector.extract_strided_slice %288 {offsets = [0, 64], sizes = [8, 32], strides = [1, 1]} : vector<8x96xf32> to vector<8x32xf32>
    %294 = arith.mulf %292, %276 : vector<8x32xf32>
    %295 = arith.mulf %291, %290 : vector<8x32xf32>
    %296 = arith.addf %294, %295 : vector<8x32xf32>
    %297 = math.tanh %296 : vector<8x32xf32>
    %298 = arith.mulf %293, %297 : vector<8x32xf32>
    %299 = vector.extract_strided_slice %175 {offsets = [48, 0], sizes = [8, 128], strides = [1, 1]} : vector<64x128xf32> to vector<8x128xf32>
    %300 = arith.truncf %298 : vector<8x32xf32> to vector<8x32xbf16>
    %cst_46 = arith.constant dense<0.000000e+00> : vector<8x128xf32>
    %301 = tpu.matmul %300, %176, %cst_46 {dimension_numbers = #tpu.dot_dimension_numbers<[1], [0], [0], [1], [0, 0, 1, 1], [], []>} : vector<8x32xbf16>, vector<32x128xbf16>, vector<8x128xf32> -> vector<8x128xf32>
    %302 = arith.addf %299, %301 : vector<8x128xf32>
    %303 = vector.extract_strided_slice %302 {offsets = [0, 0], sizes = [8, 96], strides = [1, 1]} : vector<8x128xf32> to vector<8x96xf32>
    %304 = arith.negf %303 : vector<8x96xf32>
    %305 = math.exp %304 : vector<8x96xf32>
    %cst_47 = arith.constant 1.000000e+00 : f32
    %306 = vector.broadcast %cst_47 : f32 to vector<8x96xf32>
    %307 = arith.addf %306, %305 : vector<8x96xf32>
    %308 = arith.divf %306, %307 : vector<8x96xf32>
    %309 = vector.extract_strided_slice %302 {offsets = [0, 96], sizes = [8, 32], strides = [1, 1]} : vector<8x128xf32> to vector<8x32xf32>
    %310 = math.tanh %309 : vector<8x32xf32>
    %311 = vector.extract_strided_slice %308 {offsets = [0, 0], sizes = [8, 32], strides = [1, 1]} : vector<8x96xf32> to vector<8x32xf32>
    %312 = vector.extract_strided_slice %308 {offsets = [0, 32], sizes = [8, 32], strides = [1, 1]} : vector<8x96xf32> to vector<8x32xf32>
    %313 = vector.extract_strided_slice %308 {offsets = [0, 64], sizes = [8, 32], strides = [1, 1]} : vector<8x96xf32> to vector<8x32xf32>
    %314 = arith.mulf %312, %296 : vector<8x32xf32>
    %315 = arith.mulf %311, %310 : vector<8x32xf32>
    %316 = arith.addf %314, %315 : vector<8x32xf32>
    %317 = math.tanh %316 : vector<8x32xf32>
    %318 = arith.mulf %313, %317 : vector<8x32xf32>
    %319 = vector.extract_strided_slice %175 {offsets = [56, 0], sizes = [8, 128], strides = [1, 1]} : vector<64x128xf32> to vector<8x128xf32>
    %320 = arith.truncf %318 : vector<8x32xf32> to vector<8x32xbf16>
    %cst_48 = arith.constant dense<0.000000e+00> : vector<8x128xf32>
    %321 = tpu.matmul %320, %176, %cst_48 {dimension_numbers = #tpu.dot_dimension_numbers<[1], [0], [0], [1], [0, 0, 1, 1], [], []>} : vector<8x32xbf16>, vector<32x128xbf16>, vector<8x128xf32> -> vector<8x128xf32>
    %322 = arith.addf %319, %321 : vector<8x128xf32>
    %323 = vector.extract_strided_slice %322 {offsets = [0, 0], sizes = [8, 96], strides = [1, 1]} : vector<8x128xf32> to vector<8x96xf32>
    %324 = arith.negf %323 : vector<8x96xf32>
    %325 = math.exp %324 : vector<8x96xf32>
    %cst_49 = arith.constant 1.000000e+00 : f32
    %326 = vector.broadcast %cst_49 : f32 to vector<8x96xf32>
    %327 = arith.addf %326, %325 : vector<8x96xf32>
    %328 = arith.divf %326, %327 : vector<8x96xf32>
    %329 = vector.extract_strided_slice %322 {offsets = [0, 96], sizes = [8, 32], strides = [1, 1]} : vector<8x128xf32> to vector<8x32xf32>
    %330 = math.tanh %329 : vector<8x32xf32>
    %331 = vector.extract_strided_slice %328 {offsets = [0, 0], sizes = [8, 32], strides = [1, 1]} : vector<8x96xf32> to vector<8x32xf32>
    %332 = vector.extract_strided_slice %328 {offsets = [0, 32], sizes = [8, 32], strides = [1, 1]} : vector<8x96xf32> to vector<8x32xf32>
    %333 = vector.extract_strided_slice %328 {offsets = [0, 64], sizes = [8, 32], strides = [1, 1]} : vector<8x96xf32> to vector<8x32xf32>
    %334 = arith.mulf %332, %316 : vector<8x32xf32>
    %335 = arith.mulf %331, %330 : vector<8x32xf32>
    %336 = arith.addf %334, %335 : vector<8x32xf32>
    %337 = math.tanh %336 : vector<8x32xf32>
    %338 = arith.mulf %333, %337 : vector<8x32xf32>
    %339 = arith.truncf %338 : vector<8x32xf32> to vector<8x32xbf16>
    %c0_50 = arith.constant 0 : index
    %c0_51 = arith.constant 0 : index
    %340 = vector.load %arg8[%c0_50, %c0_51] : memref<32x128xbf16, #tpu.memory_space<vmem>>, vector<32x128xbf16>
    %cst_52 = arith.constant dense<0.000000e+00> : vector<8x128xf32>
    %341 = tpu.matmul %339, %340, %cst_52 {dimension_numbers = #tpu.dot_dimension_numbers<[1], [0], [0], [1], [0, 0, 1, 1], [], []>} : vector<8x32xbf16>, vector<32x128xbf16>, vector<8x128xf32> -> vector<8x128xf32>
    %c0_53 = arith.constant 0 : index
    %c0_54 = arith.constant 0 : index
    %342 = vector.load %arg9[%c0_53, %c0_54] : memref<1x128xf32, #tpu.memory_space<vmem>>, vector<1x128xf32>
    %343 = vector.broadcast %342 : vector<1x128xf32> to vector<8x128xf32>
    %344 = arith.addf %341, %343 : vector<8x128xf32>
    %c0_55 = arith.constant 0 : index
    %c0_56 = arith.constant 0 : index
    %345 = vector.load %arg10[%c0_55, %c0_56] : memref<8x128xf32, #tpu.memory_space<vmem>>, vector<8x128xf32>
    tpu.vector_store %arg10[%c0_55, %c0_56], %344 {strides = array<i32>} : memref<8x128xf32, #tpu.memory_space<vmem>>, vector<8x128xf32>,
    return
  }
  func.func @transform_0(%arg0: i32) -> (i32, i32) {
    %c0_i32 = arith.constant 0 : i32
    %c0_i32_0 = arith.constant 0 : i32
    %c0_i32_1 = arith.constant 0 : i32
    return %c0_i32, %c0_i32_0 : i32, i32
  }
  func.func @transform_1(%arg0: i32) -> (i32, i32) {
    %c0_i32 = arith.constant 0 : i32
    %c0_i32_0 = arith.constant 0 : i32
    %c0_i32_1 = arith.constant 0 : i32
    return %c0_i32, %c0_i32_0 : i32, i32
  }
  func.func @transform_2(%arg0: i32) -> (i32, i32) {
    %c0_i32 = arith.constant 0 : i32
    %c0_i32_0 = arith.constant 0 : i32
    %c0_i32_1 = arith.constant 0 : i32
    return %c0_i32, %c0_i32_0 : i32, i32
  }
  func.func @transform_3(%arg0: i32) -> (i32, i32) {
    %c0_i32 = arith.constant 0 : i32
    %c0_i32_0 = arith.constant 0 : i32
    %c0_i32_1 = arith.constant 0 : i32
    return %c0_i32, %c0_i32_0 : i32, i32
  }
  func.func @transform_4(%arg0: i32) -> (i32, i32) {
    %c0_i32 = arith.constant 0 : i32
    %c0_i32_0 = arith.constant 0 : i32
    %c0_i32_1 = arith.constant 0 : i32
    return %c0_i32, %c0_i32_0 : i32, i32
  }
  func.func @transform_5(%arg0: i32) -> (i32, i32) {
    %c0_i32 = arith.constant 0 : i32
    %c0_i32_0 = arith.constant 0 : i32
    %c0_i32_1 = arith.constant 0 : i32
    return %c0_i32, %c0_i32_0 : i32, i32
  }
  func.func @transform_6(%arg0: i32) -> (i32, i32) {
    %c0_i32 = arith.constant 0 : i32
    %c0_i32_0 = arith.constant 0 : i32
    %c0_i32_1 = arith.constant 0 : i32
    return %c0_i32, %c0_i32_0 : i32, i32
  }
  func.func @transform_7(%arg0: i32) -> (i32, i32) {
    %c0_i32 = arith.constant 0 : i32
    %c0_i32_0 = arith.constant 0 : i32
    %c0_i32_1 = arith.constant 0 : i32
    return %c0_i32, %c0_i32_0 : i32, i32
  }
  func.func @transform_8(%arg0: i32) -> (i32, i32) {
    %c0_i32 = arith.constant 0 : i32
    %c0_i32_0 = arith.constant 0 : i32
    %c0_i32_1 = arith.constant 0 : i32
    return %c0_i32, %c0_i32_0 : i32, i32
  }
  func.func @transform_9(%arg0: i32) -> (i32, i32) {
    %c0_i32 = arith.constant 0 : i32
    %c0_i32_0 = arith.constant 0 : i32
    %c0_i32_1 = arith.constant 0 : i32
    return %c0_i32, %c0_i32_0 : i32, i32
  }
}

</mosaic_0001>

<llo_original>
// kernel: lstm_model_forward.1
$region0: #{lstm_model_forward.1}
  #allocation0 [shape = 'u32[]', space=smem, size = 0x4, offset = 0x4, fixed_abs, tag = 'smem constant byte address 0x4 - core index']
  #allocation1 [shape = 'u32[72,128]{1,0:T(1,128)}', space=vmem, size = 0x9000, scoped, tag = 'internal scratch']
  %s0 = inlined_call_operand.vmem [shape: bf16[64,8], index: 0, kind: input, shape index: {}]
  %s1 = inlined_call_operand.vmem [shape: bf16[8,128], index: 1, kind: input, shape index: {}]
  %s2 = inlined_call_operand.vmem [shape: bf16[32,128], index: 2, kind: input, shape index: {}]
  %s3 = inlined_call_operand.vmem [shape: f32[1,128], index: 3, kind: input, shape index: {}]
  %s4 = inlined_call_operand.vmem [shape: bf16[32,128], index: 4, kind: input, shape index: {}]
  %s5 = inlined_call_operand.vmem [shape: bf16[32,128], index: 5, kind: input, shape index: {}]
  %s6 = inlined_call_operand.vmem [shape: f32[1,128], index: 6, kind: input, shape index: {}]
  %s7 = inlined_call_operand.vmem [shape: bf16[32,128], index: 7, kind: input, shape index: {}]
  %s8 = inlined_call_operand.vmem [shape: f32[1,128], index: 8, kind: input, shape index: {}]
  %s9 = inlined_call_operand.vmem [shape: f32[8,128], index: 9, kind: output, shape index: {}]
  %s10 = sld [smem:[#allocation0]]
  $region46: #{lstm_model_forward.1} parent=0
    _
  %s12 = ssub.s32 1, %s10
  %s13 = scalar_select 0, %s12, %s10
  // Predicated region
  $region2: #{lstm_model_forward.1} parent=0 // pred_check
    _
  $region3: #{lstm_model_forward.1} parent=0 // pred_check_branch
    %15 = sbr.rel (0) target = $region5
  $region4: #{lstm_model_forward.1} parent=0 // pred_region
    _
  $region5: #{lstm_model_forward.1} parent=0 // pred_fallthru
    _
  // Predicated region
  $region6: #{lstm_model_forward.1} parent=0 // pred_check
    _
  $region7: #{lstm_model_forward.1} parent=0 // pred_check_branch
    %17 = sbr.rel (0) target = $region9
  $region8: #{lstm_model_forward.1} parent=0 // pred_region
    _
  $region9: #{lstm_model_forward.1} parent=0 // pred_fallthru
    _
  // Predicated region
  $region10: #{lstm_model_forward.1} parent=0 // pred_check
    _
  $region11: #{lstm_model_forward.1} parent=0 // pred_check_branch
    %19 = sbr.rel (0) target = $region13
  $region12: #{lstm_model_forward.1} parent=0 // pred_region
    _
  $region13: #{lstm_model_forward.1} parent=0 // pred_fallthru
    _
  // Predicated region
  $region14: #{lstm_model_forward.1} parent=0 // pred_check
    _
  $region15: #{lstm_model_forward.1} parent=0 // pred_check_branch
    %21 = sbr.rel (0) target = $region17
  $region16: #{lstm_model_forward.1} parent=0 // pred_region
    _
  $region17: #{lstm_model_forward.1} parent=0 // pred_fallthru
    _
  // Predicated region
  $region18: #{lstm_model_forward.1} parent=0 // pred_check
    _
  $region19: #{lstm_model_forward.1} parent=0 // pred_check_branch
    %23 = sbr.rel (0) target = $region21
  $region20: #{lstm_model_forward.1} parent=0 // pred_region
    _
  $region21: #{lstm_model_forward.1} parent=0 // pred_fallthru
    _
  // Predicated region
  $region22: #{lstm_model_forward.1} parent=0 // pred_check
    _
  $region23: #{lstm_model_forward.1} parent=0 // pred_check_branch
    %25 = sbr.rel (0) target = $region25
  $region24: #{lstm_model_forward.1} parent=0 // pred_region
    _
  $region25: #{lstm_model_forward.1} parent=0 // pred_fallthru
    _
  // Predicated region
  $region26: #{lstm_model_forward.1} parent=0 // pred_check
    _
  $region27: #{lstm_model_forward.1} parent=0 // pred_check_branch
    %27 = sbr.rel (0) target = $region29
  $region28: #{lstm_model_forward.1} parent=0 // pred_region
    _
  $region29: #{lstm_model_forward.1} parent=0 // pred_fallthru
    _
  // Predicated region
  $region30: #{lstm_model_forward.1} parent=0 // pred_check
    _
  $region31: #{lstm_model_forward.1} parent=0 // pred_check_branch
    %29 = sbr.rel (0) target = $region33
  $region32: #{lstm_model_forward.1} parent=0 // pred_region
    _
  $region33: #{lstm_model_forward.1} parent=0 // pred_fallthru
    _
  // Predicated region
  $region34: #{lstm_model_forward.1} parent=0 // pred_check
    _
  $region35: #{lstm_model_forward.1} parent=0 // pred_check_branch
    %31 = sbr.rel (0) target = $region37
  $region36: #{lstm_model_forward.1} parent=0 // pred_region
    _
  $region37: #{lstm_model_forward.1} parent=0 // pred_fallthru
    _
  %v33 = vld [vmem:[%s0] sm:$0xf]
  %v34 = vld [vmem:[%s0 + $0x4] sm:$0xf]
  %v35 = vld [vmem:[%s0 + $0x8] sm:$0xf]
  %v36 = vld [vmem:[%s0 + $0xc] sm:$0xf]
  %v37 = vld [vmem:[%s0 + $0x10] sm:$0xf]
  %v38 = vld [vmem:[%s0 + $0x14] sm:$0xf]
  %v39 = vld [vmem:[%s0 + $0x18] sm:$0xf]
  %v40 = vld [vmem:[%s0 + $0x1c] sm:$0xf]
  %v41 = vld [vmem:[%s1] sm:$0xf]
  %v42 = vld [vmem:[%s3] sm:$0x1]
  %v44 = vperm.slane %v42, 0
  %v54 = vunpack.c.l.b16 %v33
  %v55 = vunpack.c.l.b16 %v34
  %v56 = vunpack.c.l.b16 %v35
  %v57 = vunpack.c.l.b16 %v36
  %v58 = vunpack.c.l.b16 %v37
  %v59 = vunpack.c.l.b16 %v38
  %v60 = vunpack.c.l.b16 %v39
  %v61 = vunpack.c.l.b16 %v40
  %v62 = vpack.c.b16 %v55, %v54
  %v63 = vpack.c.b16 %v57, %v56
  %v64 = vpack.c.b16 %v59, %v58
  %v65 = vpack.c.b16 %v61, %v60
  %vm66 = vcmask 64512
  %v68 = vsel %vm66, %v62, 0
  %v71 = vsel %vm66, %v63, 0
  %v74 = vsel %vm66, %v64, 0
  %v77 = vsel %vm66, %v65, 0
  %vm79 = vcmask 1043456
  %v81 = vsel %vm79, %v41, 0
  %83 = vmatpush.bf16.msra.mxu0 0
  %84 = vmatpush.bf16.msra.mxu0 0
  %85 = vmatpush.bf16.msra.mxu0 0
  %86 = vmatpush.bf16.msra.mxu0 0
  %87 = vmatpush.bf16.msra.mxu0 0
  %88 = vmatpush.bf16.msra.mxu0 0
  %89 = vmatpush.bf16.msra.mxu0 0
  %90 = vmatpush.bf16.msra.mxu0 %v81
  %91 = vmatmul.bf16.gmra.mxu0 %v68
  %v92 = vpop.f32.mrf.mxu0
  %v93 = vadd.f32 %v44, %v92
  %v94 = vpop.f32.mrf.mxu0
  %v95 = vadd.f32 %v44, %v94
  %96 = vmatmul.bf16.gmra.mxu0 %v71
  %v97 = vpop.f32.mrf.mxu0
  %v98 = vadd.f32 %v44, %v97
  %v99 = vpop.f32.mrf.mxu0
  %v100 = vadd.f32 %v44, %v99
  %101 = vmatmul.bf16.gmra.mxu0 %v74
  %v102 = vpop.f32.mrf.mxu0
  %v103 = vadd.f32 %v44, %v102
  %v104 = vpop.f32.mrf.mxu0
  %v105 = vadd.f32 %v44, %v104
  %106 = vmatmul.bf16.gmra.mxu0 %v77
  %v107 = vpop.f32.mrf.mxu0
  %v108 = vadd.f32 %v44, %v107
  %v109 = vpop.f32.mrf.mxu0
  %v110 = vadd.f32 %v44, %v109
  %111 = vdwg.mxu0
  %v112 = vld [vmem:[%s2] sm:$0xf]
  %v113 = vld [vmem:[%s2 + $0x4] sm:$0xf]
  %v114 = vld [vmem:[%s2 + $0x8] sm:$0xf]
  %v115 = vld [vmem:[%s2 + $0xc] sm:$0xf]
  %v120 = vunpack.c.l.b16 %v112
  %v121 = vunpack.c.l.b16 %v113
  %v122 = vunpack.c.l.b16 %v114
  %v123 = vunpack.c.l.b16 %v115
  %v124 = vpack.c.b16 %v121, %v120
  %v125 = vpack.c.b16 %v123, %v122
  %vm128 = vcmask 261120
  %v130 = vsel %vm128, 0, 0
  %132 = vmatpush.bf16.msra.mxu0 0
  %133 = vmatpush.bf16.msra.mxu0 0
  %134 = vmatpush.bf16.msra.mxu0 0
  %135 = vmatpush.bf16.msra.mxu0 0
  %136 = vmatpush.bf16.msra.mxu0 0
  %137 = vmatpush.bf16.msra.mxu0 0
  %138 = vmatpush.bf16.msra.mxu0 %v125
  %139 = vmatpush.bf16.msra.mxu0 %v124
  %140 = vmatmul.bf16.gmra.mxu0 %v130
  %v141 = vpop.f32.mrf.mxu0
  %v142 = vadd.f32 0.0, %v141
  %v143 = vpop.f32.mrf.mxu0
  %144 = vdwg.mxu0
  %v145 = vadd.f32 %v93, %v142
  %v146 = vxor.u32 %v145, 2147483648
  %v147 = vmul.f32 %v146, 1.442695
  %v148 = vpow.pop %v147
  %v149 = vadd.f32 %v148, 1.0
  %v150 = vrcp.pop %v149
  %v151 = vmul.f32 %v149, %v150
  %v152 = vsub.f32 1.0, %v151
  %v153 = vmul.f32 %v150, %v152
  %v154 = vadd.f32 %v150, %v153
  %vm155 = vweird.f32 %v149
  %vm156 = vweird.f32 %v150
  %vm157 = vmor %vm155, %vm156
  %v158 = vsel %vm157, %v150, %v154
  %v159 = vand.u32 2147483647, %v149
  %vm160 = vcmp.eq.f32.partialorder %v159, 8.507059e+37
  %v161 = vand.u32 %v149, 2147483648
  %v162 = vor.u32 1.1754944e-38, %v161
  %v163 = vsel %vm160, %v162, %v158
  %v164 = vmul.f32 1.0, %v163
  %v165 = vtanh.pop %v145
  %v166 = vmul.f32 %v164, 0.0
  %168 = vrot.lane.b32.xlu0 %v165, 32
  %v169 = vpop.permute.xlu0 %168
  %v171 = vmul.f32 %v164, %v169
  %173 = vrot.lane.b32.xlu0 %v171, 32
  %v174 = vpop.permute.xlu0 %173
  %v176 = vadd.f32 %v166, %v174
  %v177 = vtanh.pop %v176
  %179 = vrot.lane.b32.xlu0 %v177, 32
  %v180 = vpop.permute.xlu0 %179
  %v182 = vmul.f32 %v164, %v180
  %v183 = vpack.c.bf16 %v182, %v182
  %185 = vrot.lane.b32.xlu0 %v183, 64
  %v186 = vpop.permute.xlu0 %185
  %v188 = vsel %vm128, %v186, 0
  %190 = vmatpush.bf16.msra.mxu0 0
  %191 = vmatpush.bf16.msra.mxu0 0
  %192 = vmatpush.bf16.msra.mxu0 0
  %193 = vmatpush.bf16.msra.mxu0 0
  %194 = vmatpush.bf16.msra.mxu0 0
  %195 = vmatpush.bf16.msra.mxu0 0
  %196 = vmatpush.bf16.msra.mxu0 %v125
  %197 = vmatpush.bf16.msra.mxu0 %v124
  %198 = vmatmul.bf16.gmra.mxu0 %v188
  %v199 = vpop.f32.mrf.mxu0
  %v200 = vadd.f32 0.0, %v199
  %v201 = vpop.f32.mrf.mxu0
  %202 = vdwg.mxu0
  %v203 = vadd.f32 %v95, %v200
  %v204 = vxor.u32 %v203, 2147483648
  %v205 = vmul.f32 %v204, 1.442695
  %v206 = vpow.pop %v205
  %v207 = vadd.f32 %v206, 1.0
  %v208 = vrcp.pop %v207
  %v209 = vmul.f32 %v207, %v208
  %v210 = vsub.f32 1.0, %v209
  %v211 = vmul.f32 %v208, %v210
  %v212 = vadd.f32 %v208, %v211
  %vm213 = vweird.f32 %v207
  %vm214 = vweird.f32 %v208
  %vm215 = vmor %vm213, %vm214
  %v216 = vsel %vm215, %v208, %v212
  %v217 = vand.u32 2147483647, %v207
  %vm218 = vcmp.eq.f32.partialorder %v217, 8.507059e+37
  %v219 = vand.u32 %v207, 2147483648
  %v220 = vor.u32 1.1754944e-38, %v219
  %v221 = vsel %vm218, %v220, %v216
  %v222 = vmul.f32 1.0, %v221
  %v223 = vtanh.pop %v203
  %v224 = vmul.f32 %v222, %v176
  %226 = vrot.lane.b32.xlu0 %v223, 32
  %v227 = vpop.permute.xlu0 %226
  %v229 = vmul.f32 %v222, %v227
  %231 = vrot.lane.b32.xlu0 %v229, 32
  %v232 = vpop.permute.xlu0 %231
  %v234 = vadd.f32 %v224, %v232
  %v235 = vtanh.pop %v234
  %237 = vrot.lane.b32.xlu0 %v235, 32
  %v238 = vpop.permute.xlu0 %237
  %v240 = vmul.f32 %v222, %v238
  %v241 = vpack.c.bf16 %v240, %v240
  %243 = vrot.lane.b32.xlu0 %v241, 64
  %v244 = vpop.permute.xlu0 %243
  %v246 = vsel %vm128, %v244, 0
  %248 = vmatpush.bf16.msra.mxu0 0
  %249 = vmatpush.bf16.msra.mxu0 0
  %250 = vmatpush.bf16.msra.mxu0 0
  %251 = vmatpush.bf16.msra.mxu0 0
  %252 = vmatpush.bf16.msra.mxu0 0
  %253 = vmatpush.bf16.msra.mxu0 0
  %254 = vmatpush.bf16.msra.mxu0 %v125
  %255 = vmatpush.bf16.msra.mxu0 %v124
  %256 = vmatmul.bf16.gmra.mxu0 %v246
  %v257 = vpop.f32.mrf.mxu0
  %v258 = vadd.f32 0.0, %v257
  %v259 = vpop.f32.mrf.mxu0
  %260 = vdwg.mxu0
  %v261 = vadd.f32 %v98, %v258
  %v262 = vxor.u32 %v261, 2147483648
  %v263 = vmul.f32 %v262, 1.442695
  %v264 = vpow.pop %v263
  %v265 = vadd.f32 %v264, 1.0
  %v266 = vrcp.pop %v265
  %v267 = vmul.f32 %v265, %v266
  %v268 = vsub.f32 1.0, %v267
  %v269 = vmul.f32 %v266, %v268
  %v270 = vadd.f32 %v266, %v269
  %vm271 = vweird.f32 %v265
  %vm272 = vweird.f32 %v266
  %vm273 = vmor %vm271, %vm272
  %v274 = vsel %vm273, %v266, %v270
  %v275 = vand.u32 2147483647, %v265
  %vm276 = vcmp.eq.f32.partialorder %v275, 8.507059e+37
  %v277 = vand.u32 %v265, 2147483648
  %v278 = vor.u32 1.1754944e-38, %v277
  %v279 = vsel %vm276, %v278, %v274
  %v280 = vmul.f32 1.0, %v279
  %v281 = vtanh.pop %v261
  %v282 = vmul.f32 %v280, %v234
  %284 = vrot.lane.b32.xlu0 %v281, 32
  %v285 = vpop.permute.xlu0 %284
  %v287 = vmul.f32 %v280, %v285
  %289 = vrot.lane.b32.xlu0 %v287, 32
  %v290 = vpop.permute.xlu0 %289
  %v292 = vadd.f32 %v282, %v290
  %v293 = vtanh.pop %v292
  %295 = vrot.lane.b32.xlu0 %v293, 32
  %v296 = vpop.permute.xlu0 %295
  %v298 = vmul.f32 %v280, %v296
  %v299 = vpack.c.bf16 %v298, %v298
  %301 = vrot.lane.b32.xlu0 %v299, 64
  %v302 = vpop.permute.xlu0 %301
  %v304 = vsel %vm128, %v302, 0
  %306 = vmatpush.bf16.msra.mxu0 0
  %307 = vmatpush.bf16.msra.mxu0 0
  %308 = vmatpush.bf16.msra.mxu0 0
  %309 = vmatpush.bf16.msra.mxu0 0
  %310 = vmatpush.bf16.msra.mxu0 0
  %311 = vmatpush.bf16.msra.mxu0 0
  %312 = vmatpush.bf16.msra.mxu0 %v125
  %313 = vmatpush.bf16.msra.mxu0 %v124
  %314 = vmatmul.bf16.gmra.mxu0 %v304
  %v315 = vpop.f32.mrf.mxu0
  %v316 = vadd.f32 0.0, %v315
  %v317 = vpop.f32.mrf.mxu0
  %318 = vdwg.mxu0
  %v319 = vadd.f32 %v100, %v316
  %v320 = vxor.u32 %v319, 2147483648
  %v321 = vmul.f32 %v320, 1.442695
  %v322 = vpow.pop %v321
  %v323 = vadd.f32 %v322, 1.0
  %v324 = vrcp.pop %v323
  %v325 = vmul.f32 %v323, %v324
  %v326 = vsub.f32 1.0, %v325
  %v327 = vmul.f32 %v324, %v326
  %v328 = vadd.f32 %v324, %v327
  %vm329 = vweird.f32 %v323
  %vm330 = vweird.f32 %v324
  %vm331 = vmor %vm329, %vm330
  %v332 = vsel %vm331, %v324, %v328
  %v333 = vand.u32 2147483647, %v323
  %vm334 = vcmp.eq.f32.partialorder %v333, 8.507059e+37
  %v335 = vand.u32 %v323, 2147483648
  %v336 = vor.u32 1.1754944e-38, %v335
  %v337 = vsel %vm334, %v336, %v332
  %v338 = vmul.f32 1.0, %v337
  %v339 = vtanh.pop %v319
  %v340 = vmul.f32 %v338, %v292
  %342 = vrot.lane.b32.xlu0 %v339, 32
  %v343 = vpop.permute.xlu0 %342
  %v345 = vmul.f32 %v338, %v343
  %347 = vrot.lane.b32.xlu0 %v345, 32
  %v348 = vpop.permute.xlu0 %347
  %v350 = vadd.f32 %v340, %v348
  %v351 = vtanh.pop %v350
  %353 = vrot.lane.b32.xlu0 %v351, 32
  %v354 = vpop.permute.xlu0 %353
  %v356 = vmul.f32 %v338, %v354
  %v357 = vpack.c.bf16 %v356, %v356
  %359 = vrot.lane.b32.xlu0 %v357, 64
  %v360 = vpop.permute.xlu0 %359
  %v362 = vsel %vm128, %v360, 0
  %364 = vmatpush.bf16.msra.mxu0 0
  %365 = vmatpush.bf16.msra.mxu0 0
  %366 = vmatpush.bf16.msra.mxu0 0
  %367 = vmatpush.bf16.msra.mxu0 0
  %368 = vmatpush.bf16.msra.mxu0 0
  %369 = vmatpush.bf16.msra.mxu0 0
  %370 = vmatpush.bf16.msra.mxu0 %v125
  %371 = vmatpush.bf16.msra.mxu0 %v124
  %372 = vmatmul.bf16.gmra.mxu0 %v362
  %v373 = vpop.f32.mrf.mxu0
  %v374 = vadd.f32 0.0, %v373
  %v375 = vpop.f32.mrf.mxu0
  %376 = vdwg.mxu0
  %v377 = vadd.f32 %v103, %v374
  %v378 = vxor.u32 %v377, 2147483648
  %v379 = vmul.f32 %v378, 1.442695
  %v380 = vpow.pop %v379
  %v381 = vadd.f32 %v380, 1.0
  %v382 = vrcp.pop %v381
  %v383 = vmul.f32 %v381, %v382
  %v384 = vsub.f32 1.0, %v383
  %v385 = vmul.f32 %v382, %v384
  %v386 = vadd.f32 %v382, %v385
  %vm387 = vweird.f32 %v381
  %vm388 = vweird.f32 %v382
  %vm389 = vmor %vm387, %vm388
  %v390 = vsel %vm389, %v382, %v386
  %v391 = vand.u32 2147483647, %v381
  %vm392 = vcmp.eq.f32.partialorder %v391, 8.507059e+37
  %v393 = vand.u32 %v381, 2147483648
  %v394 = vor.u32 1.1754944e-38, %v393
  %v395 = vsel %vm392, %v394, %v390
  %v396 = vmul.f32 1.0, %v395
  %v397 = vtanh.pop %v377
  %v398 = vmul.f32 %v396, %v350
  %400 = vrot.lane.b32.xlu0 %v397, 32
  %v401 = vpop.permute.xlu0 %400
  %v403 = vmul.f32 %v396, %v401
  %405 = vrot.lane.b32.xlu0 %v403, 32
  %v406 = vpop.permute.xlu0 %405
  %v408 = vadd.f32 %v398, %v406
  %v409 = vtanh.pop %v408
  %411 = vrot.lane.b32.xlu0 %v409, 32
  %v412 = vpop.permute.xlu0 %411
  %v414 = vmul.f32 %v396, %v412
  %v415 = vpack.c.bf16 %v414, %v414
  %417 = vrot.lane.b32.xlu0 %v415, 64
  %v418 = vpop.permute.xlu0 %417
  %v420 = vsel %vm128, %v418, 0
  %422 = vmatpush.bf16.msra.mxu0 0
  %423 = vmatpush.bf16.msra.mxu0 0
  %424 = vmatpush.bf16.msra.mxu0 0
  %425 = vmatpush.bf16.msra.mxu0 0
  %426 = vmatpush.bf16.msra.mxu0 0
  %427 = vmatpush.bf16.msra.mxu0 0
  %428 = vmatpush.bf16.msra.mxu0 %v125
  %429 = vmatpush.bf16.msra.mxu0 %v124
  %430 = vmatmul.bf16.gmra.mxu0 %v420
  %v431 = vpop.f32.mrf.mxu0
  %v432 = vadd.f32 0.0, %v431
  %v433 = vpop.f32.mrf.mxu0
  %434 = vdwg.mxu0
  %v435 = vadd.f32 %v105, %v432
  %v436 = vxor.u32 %v435, 2147483648
  %v437 = vmul.f32 %v436, 1.442695
  %v438 = vpow.pop %v437
  %v439 = vadd.f32 %v438, 1.0
  %v440 = vrcp.pop %v439
  %v441 = vmul.f32 %v439, %v440
  %v442 = vsub.f32 1.0, %v441
  %v443 = vmul.f32 %v440, %v442
  %v444 = vadd.f32 %v440, %v443
  %vm445 = vweird.f32 %v439
  %vm446 = vweird.f32 %v440
  %vm447 = vmor %vm445, %vm446
  %v448 = vsel %vm447, %v440, %v444
  %v449 = vand.u32 2147483647, %v439
  %vm450 = vcmp.eq.f32.partialorder %v449, 8.507059e+37
  %v451 = vand.u32 %v439, 2147483648
  %v452 = vor.u32 1.1754944e-38, %v451
  %v453 = vsel %vm450, %v452, %v448
  %v454 = vmul.f32 1.0, %v453
  %v455 = vtanh.pop %v435
  %v456 = vmul.f32 %v454, %v408
  %458 = vrot.lane.b32.xlu0 %v455, 32
  %v459 = vpop.permute.xlu0 %458
  %v461 = vmul.f32 %v454, %v459
  %463 = vrot.lane.b32.xlu0 %v461, 32
  %v464 = vpop.permute.xlu0 %463
  %v466 = vadd.f32 %v456, %v464
  %v467 = vtanh.pop %v466
  %469 = vrot.lane.b32.xlu0 %v467, 32
  %v470 = vpop.permute.xlu0 %469
  %v472 = vmul.f32 %v454, %v470
  %v473 = vpack.c.bf16 %v472, %v472
  %475 = vrot.lane.b32.xlu0 %v473, 64
  %v476 = vpop.permute.xlu0 %475
  %v478 = vsel %vm128, %v476, 0
  %480 = vmatpush.bf16.msra.mxu0 0
  %481 = vmatpush.bf16.msra.mxu0 0
  %482 = vmatpush.bf16.msra.mxu0 0
  %483 = vmatpush.bf16.msra.mxu0 0
  %484 = vmatpush.bf16.msra.mxu0 0
  %485 = vmatpush.bf16.msra.mxu0 0
  %486 = vmatpush.bf16.msra.mxu0 %v125
  %487 = vmatpush.bf16.msra.mxu0 %v124
  %488 = vmatmul.bf16.gmra.mxu0 %v478
  %v489 = vpop.f32.mrf.mxu0
  %v490 = vadd.f32 0.0, %v489
  %v491 = vpop.f32.mrf.mxu0
  %492 = vdwg.mxu0
  %v493 = vadd.f32 %v108, %v490
  %v494 = vxor.u32 %v493, 2147483648
  %v495 = vmul.f32 %v494, 1.442695
  %v496 = vpow.pop %v495
  %v497 = vadd.f32 %v496, 1.0
  %v498 = vrcp.pop %v497
  %v499 = vmul.f32 %v497, %v498
  %v500 = vsub.f32 1.0, %v499
  %v501 = vmul.f32 %v498, %v500
  %v502 = vadd.f32 %v498, %v501
  %vm503 = vweird.f32 %v497
  %vm504 = vweird.f32 %v498
  %vm505 = vmor %vm503, %vm504
  %v506 = vsel %vm505, %v498, %v502
  %v507 = vand.u32 2147483647, %v497
  %vm508 = vcmp.eq.f32.partialorder %v507, 8.507059e+37
  %v509 = vand.u32 %v497, 2147483648
  %v510 = vor.u32 1.1754944e-38, %v509
  %v511 = vsel %vm508, %v510, %v506
  %v512 = vmul.f32 1.0, %v511
  %v513 = vtanh.pop %v493
  %v514 = vmul.f32 %v512, %v466
  %516 = vrot.lane.b32.xlu0 %v513, 32
  %v517 = vpop.permute.xlu0 %516
  %v519 = vmul.f32 %v512, %v517
  %521 = vrot.lane.b32.xlu0 %v519, 32
  %v522 = vpop.permute.xlu0 %521
  %v524 = vadd.f32 %v514, %v522
  %v525 = vtanh.pop %v524
  %527 = vrot.lane.b32.xlu0 %v525, 32
  %v528 = vpop.permute.xlu0 %527
  %v530 = vmul.f32 %v512, %v528
  %v531 = vpack.c.bf16 %v530, %v530
  %533 = vrot.lane.b32.xlu0 %v531, 64
  %v534 = vpop.permute.xlu0 %533
  %v536 = vsel %vm128, %v534, 0
  %538 = vmatpush.bf16.msra.mxu0 0
  %539 = vmatpush.bf16.msra.mxu0 0
  %540 = vmatpush.bf16.msra.mxu0 0
  %541 = vmatpush.bf16.msra.mxu0 0
  %542 = vmatpush.bf16.msra.mxu0 0
  %543 = vmatpush.bf16.msra.mxu0 0
  %544 = vmatpush.bf16.msra.mxu0 %v125
  %545 = vmatpush.bf16.msra.mxu0 %v124
  %546 = vmatmul.bf16.gmra.mxu0 %v536
  %v547 = vpop.f32.mrf.mxu0
  %v548 = vadd.f32 0.0, %v547
  %v549 = vpop.f32.mrf.mxu0
  %550 = vdwg.mxu0
  %v551 = vadd.f32 %v110, %v548
  %v552 = vxor.u32 %v551, 2147483648
  %v553 = vmul.f32 %v552, 1.442695
  %v554 = vpow.pop %v553
  %v555 = vadd.f32 %v554, 1.0
  %v556 = vrcp.pop %v555
  %v557 = vmul.f32 %v555, %v556
  %v558 = vsub.f32 1.0, %v557
  %v559 = vmul.f32 %v556, %v558
  %v560 = vadd.f32 %v556, %v559
  %vm561 = vweird.f32 %v555
  %vm562 = vweird.f32 %v556
  %vm563 = vmor %vm561, %vm562
  %v564 = vsel %vm563, %v556, %v560
  %v565 = vand.u32 2147483647, %v555
  %vm566 = vcmp.eq.f32.partialorder %v565, 8.507059e+37
  %v567 = vand.u32 %v555, 2147483648
  %v568 = vor.u32 1.1754944e-38, %v567
  %v569 = vsel %vm566, %v568, %v564
  %v570 = vmul.f32 1.0, %v569
  %v571 = vtanh.pop %v551
  %v572 = vmul.f32 %v570, %v524
  %574 = vrot.lane.b32.xlu0 %v571, 32
  %v575 = vpop.permute.xlu0 %574
  %v577 = vmul.f32 %v570, %v575
  %579 = vrot.lane.b32.xlu0 %v577, 32
  %v580 = vpop.permute.xlu0 %579
  %v582 = vadd.f32 %v572, %v580
  %v583 = vtanh.pop %v582
  %585 = vrot.lane.b32.xlu0 %v583, 32
  %v586 = vpop.permute.xlu0 %585
  %v588 = vmul.f32 %v570, %v586
  %v589 = vpack.c.bf16 %v240, %v182
  %v590 = vpack.c.bf16 %v356, %v298
  %v591 = vpack.c.bf16 %v472, %v414
  %v592 = vpack.c.bf16 %v588, %v530
  %v593 = vld [vmem:[%s4] sm:$0xf]
  %v594 = vld [vmem:[%s4 + $0x4] sm:$0xf]
  %v595 = vld [vmem:[%s4 + $0x8] sm:$0xf]
  %v596 = vld [vmem:[%s4 + $0xc] sm:$0xf]
  %v597 = vld [vmem:[%s6] sm:$0x1]
  %v599 = vperm.slane %v597, 0
  %605 = vrot.lane.b32.xlu0 %v589, 64
  %v606 = vpop.permute.xlu0 %605
  %607 = vrot.lane.b32.xlu0 %v590, 64
  %v608 = vpop.permute.xlu0 %607
  %609 = vrot.lane.b32.xlu0 %v591, 64
  %v610 = vpop.permute.xlu0 %609
  %611 = vrot.lane.b32.xlu0 %v592, 64
  %v612 = vpop.permute.xlu0 %611
  %v617 = vunpack.c.l.b16 %v593
  %v618 = vunpack.c.l.b16 %v594
  %v619 = vunpack.c.l.b16 %v595
  %v620 = vunpack.c.l.b16 %v596
  %v621 = vpack.c.b16 %v618, %v617
  %v622 = vpack.c.b16 %v620, %v619
  %v626 = vsel %vm128, %v606, 0
  %v629 = vsel %vm128, %v608, 0
  %v632 = vsel %vm128, %v610, 0
  %v635 = vsel %vm128, %v612, 0
  %637 = vmatpush.bf16.msra.mxu0 0
  %638 = vmatpush.bf16.msra.mxu0 0
  %639 = vmatpush.bf16.msra.mxu0 0
  %640 = vmatpush.bf16.msra.mxu0 0
  %641 = vmatpush.bf16.msra.mxu0 0
  %642 = vmatpush.bf16.msra.mxu0 0
  %643 = vmatpush.bf16.msra.mxu0 %v622
  %644 = vmatpush.bf16.msra.mxu0 %v621
  %645 = vmatmul.bf16.gmra.mxu0 %v626
  %v646 = vpop.f32.mrf.mxu0
  %v647 = vadd.f32 %v599, %v646
  %v648 = vpop.f32.mrf.mxu0
  %v649 = vadd.f32 %v599, %v648
  %650 = vmatmul.bf16.gmra.mxu0 %v629
  %v651 = vpop.f32.mrf.mxu0
  %v652 = vadd.f32 %v599, %v651
  %v653 = vpop.f32.mrf.mxu0
  %v654 = vadd.f32 %v599, %v653
  %655 = vmatmul.bf16.gmra.mxu0 %v632
  %v656 = vpop.f32.mrf.mxu0
  %v657 = vadd.f32 %v599, %v656
  %v658 = vpop.f32.mrf.mxu0
  %v659 = vadd.f32 %v599, %v658
  %660 = vmatmul.bf16.gmra.mxu0 %v635
  %v661 = vpop.f32.mrf.mxu0
  %v662 = vadd.f32 %v599, %v661
  %v663 = vpop.f32.mrf.mxu0
  %v664 = vadd.f32 %v599, %v663
  %665 = vdwg.mxu0
  %v666 = vld [vmem:[%s5] sm:$0xf]
  %v667 = vld [vmem:[%s5 + $0x4] sm:$0xf]
  %v668 = vld [vmem:[%s5 + $0x8] sm:$0xf]
  %v669 = vld [vmem:[%s5 + $0xc] sm:$0xf]
  %v674 = vunpack.c.l.b16 %v666
  %v675 = vunpack.c.l.b16 %v667
  %v676 = vunpack.c.l.b16 %v668
  %v677 = vunpack.c.l.b16 %v669
  %v678 = vpack.c.b16 %v675, %v674
  %v679 = vpack.c.b16 %v677, %v676
  %682 = vmatpush.bf16.msra.mxu0 0
  %683 = vmatpush.bf16.msra.mxu0 0
  %684 = vmatpush.bf16.msra.mxu0 0
  %685 = vmatpush.bf16.msra.mxu0 0
  %686 = vmatpush.bf16.msra.mxu0 0
  %687 = vmatpush.bf16.msra.mxu0 0
  %688 = vmatpush.bf16.msra.mxu0 %v679
  %689 = vmatpush.bf16.msra.mxu0 %v678
  %690 = vmatmul.bf16.gmra.mxu0 %v130
  %v691 = vpop.f32.mrf.mxu0
  %v692 = vadd.f32 0.0, %v691
  %v693 = vpop.f32.mrf.mxu0
  %694 = vdwg.mxu0
  %v695 = vadd.f32 %v647, %v692
  %v696 = vxor.u32 %v695, 2147483648
  %v697 = vmul.f32 %v696, 1.442695
  %v698 = vpow.pop %v697
  %v699 = vadd.f32 %v698, 1.0
  %v700 = vrcp.pop %v699
  %v701 = vmul.f32 %v699, %v700
  %v702 = vsub.f32 1.0, %v701
  %v703 = vmul.f32 %v700, %v702
  %v704 = vadd.f32 %v700, %v703
  %vm705 = vweird.f32 %v699
  %vm706 = vweird.f32 %v700
  %vm707 = vmor %vm705, %vm706
  %v708 = vsel %vm707, %v700, %v704
  %v709 = vand.u32 2147483647, %v699
  %vm710 = vcmp.eq.f32.partialorder %v709, 8.507059e+37
  %v711 = vand.u32 %v699, 2147483648
  %v712 = vor.u32 1.1754944e-38, %v711
  %v713 = vsel %vm710, %v712, %v708
  %v714 = vmul.f32 1.0, %v713
  %v715 = vtanh.pop %v695
  %v716 = vmul.f32 %v714, 0.0
  %718 = vrot.lane.b32.xlu0 %v715, 32
  %v719 = vpop.permute.xlu0 %718
  %v721 = vmul.f32 %v714, %v719
  %723 = vrot.lane.b32.xlu0 %v721, 32
  %v724 = vpop.permute.xlu0 %723
  %v726 = vadd.f32 %v716, %v724
  %v727 = vtanh.pop %v726
  %729 = vrot.lane.b32.xlu0 %v727, 32
  %v730 = vpop.permute.xlu0 %729
  %v732 = vmul.f32 %v714, %v730
  %v733 = vpack.c.bf16 %v732, %v732
  %735 = vrot.lane.b32.xlu0 %v733, 64
  %v736 = vpop.permute.xlu0 %735
  %v738 = vsel %vm128, %v736, 0
  %740 = vmatpush.bf16.msra.mxu0 0
  %741 = vmatpush.bf16.msra.mxu0 0
  %742 = vmatpush.bf16.msra.mxu0 0
  %743 = vmatpush.bf16.msra.mxu0 0
  %744 = vmatpush.bf16.msra.mxu0 0
  %745 = vmatpush.bf16.msra.mxu0 0
  %746 = vmatpush.bf16.msra.mxu0 %v679
  %747 = vmatpush.bf16.msra.mxu0 %v678
  %748 = vmatmul.bf16.gmra.mxu0 %v738
  %v749 = vpop.f32.mrf.mxu0
  %v750 = vadd.f32 0.0, %v749
  %v751 = vpop.f32.mrf.mxu0
  %752 = vdwg.mxu0
  %v753 = vadd.f32 %v649, %v750
  %v754 = vxor.u32 %v753, 2147483648
  %v755 = vmul.f32 %v754, 1.442695
  %v756 = vpow.pop %v755
  %v757 = vadd.f32 %v756, 1.0
  %v758 = vrcp.pop %v757
  %v759 = vmul.f32 %v757, %v758
  %v760 = vsub.f32 1.0, %v759
  %v761 = vmul.f32 %v758, %v760
  %v762 = vadd.f32 %v758, %v761
  %vm763 = vweird.f32 %v757
  %vm764 = vweird.f32 %v758
  %vm765 = vmor %vm763, %vm764
  %v766 = vsel %vm765, %v758, %v762
  %v767 = vand.u32 2147483647, %v757
  %vm768 = vcmp.eq.f32.partialorder %v767, 8.507059e+37
  %v769 = vand.u32 %v757, 2147483648
  %v770 = vor.u32 1.1754944e-38, %v769
  %v771 = vsel %vm768, %v770, %v766
  %v772 = vmul.f32 1.0, %v771
  %v773 = vtanh.pop %v753
  %v774 = vmul.f32 %v772, %v726
  %776 = vrot.lane.b32.xlu0 %v773, 32
  %v777 = vpop.permute.xlu0 %776
  %v779 = vmul.f32 %v772, %v777
  %781 = vrot.lane.b32.xlu0 %v779, 32
  %v782 = vpop.permute.xlu0 %781
  %v784 = vadd.f32 %v774, %v782
  %v785 = vtanh.pop %v784
  %787 = vrot.lane.b32.xlu0 %v785, 32
  %v788 = vpop.permute.xlu0 %787
  %v790 = vmul.f32 %v772, %v788
  %v791 = vpack.c.bf16 %v790, %v790
  %793 = vrot.lane.b32.xlu0 %v791, 64
  %v794 = vpop.permute.xlu0 %793
  %v796 = vsel %vm128, %v794, 0
  %798 = vmatpush.bf16.msra.mxu0 0
  %799 = vmatpush.bf16.msra.mxu0 0
  %800 = vmatpush.bf16.msra.mxu0 0
  %801 = vmatpush.bf16.msra.mxu0 0
  %802 = vmatpush.bf16.msra.mxu0 0
  %803 = vmatpush.bf16.msra.mxu0 0
  %804 = vmatpush.bf16.msra.mxu0 %v679
  %805 = vmatpush.bf16.msra.mxu0 %v678
  %806 = vmatmul.bf16.gmra.mxu0 %v796
  %v807 = vpop.f32.mrf.mxu0
  %v808 = vadd.f32 0.0, %v807
  %v809 = vpop.f32.mrf.mxu0
  %810 = vdwg.mxu0
  %v811 = vadd.f32 %v652, %v808
  %v812 = vxor.u32 %v811, 2147483648
  %v813 = vmul.f32 %v812, 1.442695
  %v814 = vpow.pop %v813
  %v815 = vadd.f32 %v814, 1.0
  %v816 = vrcp.pop %v815
  %v817 = vmul.f32 %v815, %v816
  %v818 = vsub.f32 1.0, %v817
  %v819 = vmul.f32 %v816, %v818
  %v820 = vadd.f32 %v816, %v819
  %vm821 = vweird.f32 %v815
  %vm822 = vweird.f32 %v816
  %vm823 = vmor %vm821, %vm822
  %v824 = vsel %vm823, %v816, %v820
  %v825 = vand.u32 2147483647, %v815
  %vm826 = vcmp.eq.f32.partialorder %v825, 8.507059e+37
  %v827 = vand.u32 %v815, 2147483648
  %v828 = vor.u32 1.1754944e-38, %v827
  %v829 = vsel %vm826, %v828, %v824
  %v830 = vmul.f32 1.0, %v829
  %v831 = vtanh.pop %v811
  %v832 = vmul.f32 %v830, %v784
  %834 = vrot.lane.b32.xlu0 %v831, 32
  %v835 = vpop.permute.xlu0 %834
  %v837 = vmul.f32 %v830, %v835
  %839 = vrot.lane.b32.xlu0 %v837, 32
  %v840 = vpop.permute.xlu0 %839
  %v842 = vadd.f32 %v832, %v840
  %v843 = vtanh.pop %v842
  %845 = vrot.lane.b32.xlu0 %v843, 32
  %v846 = vpop.permute.xlu0 %845
  %v848 = vmul.f32 %v830, %v846
  %v849 = vpack.c.bf16 %v848, %v848
  %851 = vrot.lane.b32.xlu0 %v849, 64
  %v852 = vpop.permute.xlu0 %851
  %v854 = vsel %vm128, %v852, 0
  %856 = vmatpush.bf16.msra.mxu0 0
  %857 = vmatpush.bf16.msra.mxu0 0
  %858 = vmatpush.bf16.msra.mxu0 0
  %859 = vmatpush.bf16.msra.mxu0 0
  %860 = vmatpush.bf16.msra.mxu0 0
  %861 = vmatpush.bf16.msra.mxu0 0
  %862 = vmatpush.bf16.msra.mxu0 %v679
  %863 = vmatpush.bf16.msra.mxu0 %v678
  %864 = vmatmul.bf16.gmra.mxu0 %v854
  %v865 = vpop.f32.mrf.mxu0
  %v866 = vadd.f32 0.0, %v865
  %v867 = vpop.f32.mrf.mxu0
  %868 = vdwg.mxu0
  %v869 = vadd.f32 %v654, %v866
  %v870 = vxor.u32 %v869, 2147483648
  %v871 = vmul.f32 %v870, 1.442695
  %v872 = vpow.pop %v871
  %v873 = vadd.f32 %v872, 1.0
  %v874 = vrcp.pop %v873
  %v875 = vmul.f32 %v873, %v874
  %v876 = vsub.f32 1.0, %v875
  %v877 = vmul.f32 %v874, %v876
  %v878 = vadd.f32 %v874, %v877
  %vm879 = vweird.f32 %v873
  %vm880 = vweird.f32 %v874
  %vm881 = vmor %vm879, %vm880
  %v882 = vsel %vm881, %v874, %v878
  %v883 = vand.u32 2147483647, %v873
  %vm884 = vcmp.eq.f32.partialorder %v883, 8.507059e+37
  %v885 = vand.u32 %v873, 2147483648
  %v886 = vor.u32 1.1754944e-38, %v885
  %v887 = vsel %vm884, %v886, %v882
  %v888 = vmul.f32 1.0, %v887
  %v889 = vtanh.pop %v869
  %v890 = vmul.f32 %v888, %v842
  %892 = vrot.lane.b32.xlu0 %v889, 32
  %v893 = vpop.permute.xlu0 %892
  %v895 = vmul.f32 %v888, %v893
  %897 = vrot.lane.b32.xlu0 %v895, 32
  %v898 = vpop.permute.xlu0 %897
  %v900 = vadd.f32 %v890, %v898
  %v901 = vtanh.pop %v900
  %903 = vrot.lane.b32.xlu0 %v901, 32
  %v904 = vpop.permute.xlu0 %903
  %v906 = vmul.f32 %v888, %v904
  %v907 = vpack.c.bf16 %v906, %v906
  %909 = vrot.lane.b32.xlu0 %v907, 64
  %v910 = vpop.permute.xlu0 %909
  %v912 = vsel %vm128, %v910, 0
  %914 = vmatpush.bf16.msra.mxu0 0
  %915 = vmatpush.bf16.msra.mxu0 0
  %916 = vmatpush.bf16.msra.mxu0 0
  %917 = vmatpush.bf16.msra.mxu0 0
  %918 = vmatpush.bf16.msra.mxu0 0
  %919 = vmatpush.bf16.msra.mxu0 0
  %920 = vmatpush.bf16.msra.mxu0 %v679
  %921 = vmatpush.bf16.msra.mxu0 %v678
  %922 = vmatmul.bf16.gmra.mxu0 %v912
  %v923 = vpop.f32.mrf.mxu0
  %v924 = vadd.f32 0.0, %v923
  %v925 = vpop.f32.mrf.mxu0
  %926 = vdwg.mxu0
  %v927 = vadd.f32 %v657, %v924
  %v928 = vxor.u32 %v927, 2147483648
  %v929 = vmul.f32 %v928, 1.442695
  %v930 = vpow.pop %v929
  %v931 = vadd.f32 %v930, 1.0
  %v932 = vrcp.pop %v931
  %v933 = vmul.f32 %v931, %v932
  %v934 = vsub.f32 1.0, %v933
  %v935 = vmul.f32 %v932, %v934
  %v936 = vadd.f32 %v932, %v935
  %vm937 = vweird.f32 %v931
  %vm938 = vweird.f32 %v932
  %vm939 = vmor %vm937, %vm938
  %v940 = vsel %vm939, %v932, %v936
  %v941 = vand.u32 2147483647, %v931
  %vm942 = vcmp.eq.f32.partialorder %v941, 8.507059e+37
  %v943 = vand.u32 %v931, 2147483648
  %v944 = vor.u32 1.1754944e-38, %v943
  %v945 = vsel %vm942, %v944, %v940
  %v946 = vmul.f32 1.0, %v945
  %v947 = vtanh.pop %v927
  %v948 = vmul.f32 %v946, %v900
  %950 = vrot.lane.b32.xlu0 %v947, 32
  %v951 = vpop.permute.xlu0 %950
  %v953 = vmul.f32 %v946, %v951
  %955 = vrot.lane.b32.xlu0 %v953, 32
  %v956 = vpop.permute.xlu0 %955
  %v958 = vadd.f32 %v948, %v956
  %v959 = vtanh.pop %v958
  %961 = vrot.lane.b32.xlu0 %v959, 32
  %v962 = vpop.permute.xlu0 %961
  %v964 = vmul.f32 %v946, %v962
  %v965 = vpack.c.bf16 %v964, %v964
  %967 = vrot.lane.b32.xlu0 %v965, 64
  %v968 = vpop.permute.xlu0 %967
  %v970 = vsel %vm128, %v968, 0
  %972 = vmatpush.bf16.msra.mxu0 0
  %973 = vmatpush.bf16.msra.mxu0 0
  %974 = vmatpush.bf16.msra.mxu0 0
  %975 = vmatpush.bf16.msra.mxu0 0
  %976 = vmatpush.bf16.msra.mxu0 0
  %977 = vmatpush.bf16.msra.mxu0 0
  %978 = vmatpush.bf16.msra.mxu0 %v679
  %979 = vmatpush.bf16.msra.mxu0 %v678
  %980 = vmatmul.bf16.gmra.mxu0 %v970
  %v981 = vpop.f32.mrf.mxu0
  %v982 = vadd.f32 0.0, %v981
  %v983 = vpop.f32.mrf.mxu0
  %984 = vdwg.mxu0
  %v985 = vadd.f32 %v659, %v982
  %v986 = vxor.u32 %v985, 2147483648
  %v987 = vmul.f32 %v986, 1.442695
  %v988 = vpow.pop %v987
  %v989 = vadd.f32 %v988, 1.0
  %v990 = vrcp.pop %v989
  %v991 = vmul.f32 %v989, %v990
  %v992 = vsub.f32 1.0, %v991
  %v993 = vmul.f32 %v990, %v992
  %v994 = vadd.f32 %v990, %v993
  %vm995 = vweird.f32 %v989
  %vm996 = vweird.f32 %v990
  %vm997 = vmor %vm995, %vm996
  %v998 = vsel %vm997, %v990, %v994
  %v999 = vand.u32 2147483647, %v989
  %vm1000 = vcmp.eq.f32.partialorder %v999, 8.507059e+37
  %v1001 = vand.u32 %v989, 2147483648
  %v1002 = vor.u32 1.1754944e-38, %v1001
  %v1003 = vsel %vm1000, %v1002, %v998
  %v1004 = vmul.f32 1.0, %v1003
  %v1005 = vtanh.pop %v985
  %v1006 = vmul.f32 %v1004, %v958
  %1008 = vrot.lane.b32.xlu0 %v1005, 32
  %v1009 = vpop.permute.xlu0 %1008
  %v1011 = vmul.f32 %v1004, %v1009
  %1013 = vrot.lane.b32.xlu0 %v1011, 32
  %v1014 = vpop.permute.xlu0 %1013
  %v1016 = vadd.f32 %v1006, %v1014
  %v1017 = vtanh.pop %v1016
  %1019 = vrot.lane.b32.xlu0 %v1017, 32
  %v1020 = vpop.permute.xlu0 %1019
  %v1022 = vmul.f32 %v1004, %v1020
  %v1023 = vpack.c.bf16 %v1022, %v1022
  %1025 = vrot.lane.b32.xlu0 %v1023, 64
  %v1026 = vpop.permute.xlu0 %1025
  %v1028 = vsel %vm128, %v1026, 0
  %1030 = vmatpush.bf16.msra.mxu0 0
  %1031 = vmatpush.bf16.msra.mxu0 0
  %1032 = vmatpush.bf16.msra.mxu0 0
  %1033 = vmatpush.bf16.msra.mxu0 0
  %1034 = vmatpush.bf16.msra.mxu0 0
  %1035 = vmatpush.bf16.msra.mxu0 0
  %1036 = vmatpush.bf16.msra.mxu0 %v679
  %1037 = vmatpush.bf16.msra.mxu0 %v678
  %1038 = vmatmul.bf16.gmra.mxu0 %v1028
  %v1039 = vpop.f32.mrf.mxu0
  %v1040 = vadd.f32 0.0, %v1039
  %v1041 = vpop.f32.mrf.mxu0
  %1042 = vdwg.mxu0
  %v1043 = vadd.f32 %v662, %v1040
  %v1044 = vxor.u32 %v1043, 2147483648
  %v1045 = vmul.f32 %v1044, 1.442695
  %v1046 = vpow.pop %v1045
  %v1047 = vadd.f32 %v1046, 1.0
  %v1048 = vrcp.pop %v1047
  %v1049 = vmul.f32 %v1047, %v1048
  %v1050 = vsub.f32 1.0, %v1049
  %v1051 = vmul.f32 %v1048, %v1050
  %v1052 = vadd.f32 %v1048, %v1051
  %vm1053 = vweird.f32 %v1047
  %vm1054 = vweird.f32 %v1048
  %vm1055 = vmor %vm1053, %vm1054
  %v1056 = vsel %vm1055, %v1048, %v1052
  %v1057 = vand.u32 2147483647, %v1047
  %vm1058 = vcmp.eq.f32.partialorder %v1057, 8.507059e+37
  %v1059 = vand.u32 %v1047, 2147483648
  %v1060 = vor.u32 1.1754944e-38, %v1059
  %v1061 = vsel %vm1058, %v1060, %v1056
  %v1062 = vmul.f32 1.0, %v1061
  %v1063 = vtanh.pop %v1043
  %v1064 = vmul.f32 %v1062, %v1016
  %1066 = vrot.lane.b32.xlu0 %v1063, 32
  %v1067 = vpop.permute.xlu0 %1066
  %v1069 = vmul.f32 %v1062, %v1067
  %1071 = vrot.lane.b32.xlu0 %v1069, 32
  %v1072 = vpop.permute.xlu0 %1071
  %v1074 = vadd.f32 %v1064, %v1072
  %v1075 = vtanh.pop %v1074
  %1077 = vrot.lane.b32.xlu0 %v1075, 32
  %v1078 = vpop.permute.xlu0 %1077
  %v1080 = vmul.f32 %v1062, %v1078
  %v1081 = vpack.c.bf16 %v1080, %v1080
  %1083 = vrot.lane.b32.xlu0 %v1081, 64
  %v1084 = vpop.permute.xlu0 %1083
  %v1086 = vsel %vm128, %v1084, 0
  %1088 = vmatpush.bf16.msra.mxu0 0
  %1089 = vmatpush.bf16.msra.mxu0 0
  %1090 = vmatpush.bf16.msra.mxu0 0
  %1091 = vmatpush.bf16.msra.mxu0 0
  %1092 = vmatpush.bf16.msra.mxu0 0
  %1093 = vmatpush.bf16.msra.mxu0 0
  %1094 = vmatpush.bf16.msra.mxu0 %v679
  %1095 = vmatpush.bf16.msra.mxu0 %v678
  %1096 = vmatmul.bf16.gmra.mxu0 %v1086
  %v1097 = vpop.f32.mrf.mxu0
  %v1098 = vadd.f32 0.0, %v1097
  %v1099 = vpop.f32.mrf.mxu0
  %1100 = vdwg.mxu0
  %v1101 = vadd.f32 %v664, %v1098
  %v1102 = vxor.u32 %v1101, 2147483648
  %v1103 = vmul.f32 %v1102, 1.442695
  %v1104 = vpow.pop %v1103
  %v1105 = vadd.f32 %v1104, 1.0
  %v1106 = vrcp.pop %v1105
  %v1107 = vmul.f32 %v1105, %v1106
  %v1108 = vsub.f32 1.0, %v1107
  %v1109 = vmul.f32 %v1106, %v1108
  %v1110 = vadd.f32 %v1106, %v1109
  %vm1111 = vweird.f32 %v1105
  %vm1112 = vweird.f32 %v1106
  %vm1113 = vmor %vm1111, %vm1112
  %v1114 = vsel %vm1113, %v1106, %v1110
  %v1115 = vand.u32 2147483647, %v1105
  %vm1116 = vcmp.eq.f32.partialorder %v1115, 8.507059e+37
  %v1117 = vand.u32 %v1105, 2147483648
  %v1118 = vor.u32 1.1754944e-38, %v1117
  %v1119 = vsel %vm1116, %v1118, %v1114
  %v1120 = vmul.f32 1.0, %v1119
  %v1121 = vtanh.pop %v1101
  %v1122 = vmul.f32 %v1120, %v1074
  %1124 = vrot.lane.b32.xlu0 %v1121, 32
  %v1125 = vpop.permute.xlu0 %1124
  %v1127 = vmul.f32 %v1120, %v1125
  %1129 = vrot.lane.b32.xlu0 %v1127, 32
  %v1130 = vpop.permute.xlu0 %1129
  %v1132 = vadd.f32 %v1122, %v1130
  %v1133 = vtanh.pop %v1132
  %1135 = vrot.lane.b32.xlu0 %v1133, 32
  %v1136 = vpop.permute.xlu0 %1135
  %v1138 = vmul.f32 %v1120, %v1136
  %v1139 = vpack.c.bf16 %v1138, %v1138
  %v1140 = vld [vmem:[%s7] sm:$0xf]
  %v1141 = vld [vmem:[%s7 + $0x4] sm:$0xf]
  %v1142 = vld [vmem:[%s7 + $0x8] sm:$0xf]
  %v1143 = vld [vmem:[%s7 + $0xc] sm:$0xf]
  %v1144 = vld [vmem:[%s8] sm:$0x1]
  %v1146 = vperm.slane %v1144, 0
  %1149 = vrot.lane.b32.xlu0 %v1139, 64
  %v1150 = vpop.permute.xlu0 %1149
  %v1155 = vunpack.c.l.b16 %v1140
  %v1156 = vunpack.c.l.b16 %v1141
  %v1157 = vunpack.c.l.b16 %v1142
  %v1158 = vunpack.c.l.b16 %v1143
  %v1159 = vpack.c.b16 %v1156, %v1155
  %v1160 = vpack.c.b16 %v1158, %v1157
  %v1164 = vsel %vm128, %v1150, 0
  %1166 = vmatpush.bf16.msra.mxu0 0
  %1167 = vmatpush.bf16.msra.mxu0 0
  %1168 = vmatpush.bf16.msra.mxu0 0
  %1169 = vmatpush.bf16.msra.mxu0 0
  %1170 = vmatpush.bf16.msra.mxu0 0
  %1171 = vmatpush.bf16.msra.mxu0 0
  %1172 = vmatpush.bf16.msra.mxu0 %v1160
  %1173 = vmatpush.bf16.msra.mxu0 %v1159
  %1174 = vmatmul.bf16.gmra.mxu0 %v1164
  %v1175 = vpop.f32.mrf.mxu0
  %v1176 = vadd.f32 %v1146, %v1175
  %v1177 = vpop.f32.mrf.mxu0
  %1178 = vdwg.mxu0
  %1179 = vst [vmem:[%s9] sm:$0xff] %v1176
  // Predicated region
  $region38: #{lstm_model_forward.1} parent=0 // pred_check
    _
  $region39: #{lstm_model_forward.1} parent=0 // pred_check_branch
    %1181 = sbr.rel (0) target = $region41
  $region40: #{lstm_model_forward.1} parent=0 // pred_region
    _
  $region41: #{lstm_model_forward.1} parent=0 // pred_fallthru
    _
  // Predicated region
  $region42: #{lstm_model_forward.1} parent=0 // pred_check
    _
  $region43: #{lstm_model_forward.1} parent=0 // pred_check_branch
    %1183 = sbr.rel (0) target = $region45
  $region44: #{lstm_model_forward.1} parent=0 // pred_region
    _
  $region45: #{lstm_model_forward.1} parent=0 // pred_fallthru
    _

</llo_original>
